<compile_context>
chip_gen: v7x
topology: tpu7x:2x2x1
jax: 0.10.0
libtpu: 0.0.40
codegen_flags: <defaults>
</compile_context>

<pallas_src>
import math

import jax
import jax.numpy as jnp
from jax import lax
from jax.experimental import pallas as pl
from jax.experimental.pallas import tpu as pltpu


def _round_up(n, m):
    return ((n + m - 1) // m) * m


def _calora_kernel(x_ref, w_ref, a_ref, b_ref, mask_ref, bias2_ref, o_ref,
                   acc_ref, z_ref):
    """One (tm, tn) output tile, accumulated over the K (Din) grid axis.

    x_ref    : [tm, tk]       activation tile                      (compute dtype)
    w_ref    : [tn, tk]       base weight tile, untransposed       (compute dtype)
    a_ref    : [nc_pad, tk]   lora_A rows 0..num_class-1, padded   (compute dtype)
    b_ref    : [tn, nc_pad]   lora_B cols 0..num_class-1, padded   (compute dtype)
    mask_ref : [tm, nc_pad]   alpha * one_hot(top-k classes)       (f32)
    bias2_ref: [1, tn]        2 * base bias (torch adds bias twice)(f32)
    o_ref    : [tm, tn]       output tile                          (f32)
    acc_ref  : [tm, tn]       f32 scratch: base matmul accumulator
    z_ref    : [tm, nc_pad]   f32 scratch: x @ lora_A^T accumulator
    """
    k = pl.program_id(2)
    contract_last = (((1,), (1,)), ((), ()))  # contract last axis of both operands

    @pl.when(k == 0)
    def _():
        acc_ref[...] = jnp.zeros_like(acc_ref)
        z_ref[...] = jnp.zeros_like(z_ref)

    x = x_ref[...]
    # Base matmul x @ W^T (W kept untransposed; MXU handles the transposed operand natively).
    acc_ref[...] += lax.dot_general(x, w_ref[...], contract_last,
                                    preferred_element_type=jnp.float32)
    # LoRA-A projection reuses the x tile already resident in VMEM (x read from HBM once).
    z_ref[...] += lax.dot_general(x, a_ref[...], contract_last,
                                  preferred_element_type=jnp.float32)

    @pl.when(k == pl.num_programs(2) - 1)
    def _():
        # lora[b, o] = sum_c mask[b, c] * z[b, c] * lora_B[o, c]   (mask already carries alpha)
        zw = (mask_ref[...] * z_ref[...]).astype(b_ref.dtype)
        lora = lax.dot_general(zw, b_ref[...], contract_last,
                               preferred_element_type=jnp.float32)
        o_ref[...] = (acc_ref[...] + lora + bias2_ref[...]).astype(o_ref.dtype)


def calora_forward(x, weight, bias, lora_A, lora_B, pseudo_index, *,
                   num_class, rank, alpha, top_k,
                   compute_dtype=jnp.bfloat16, tm=256, tn=256, tk=512):
    """Forward pass of CALoraLinear (pseudo_index provided). Matches the torch module,
    including the double-bias add and the repeated-class-index gather quirk."""
    # TODO(synk): the module's `pseudo_index is None` branch (plain base_layer(x)) is not
    # exercised here; it is just the base matmul with a single bias.
    Bn, din = x.shape
    dout = weight.shape[0]

    # --- tile sizes: v6e/v7x MXU is 2x256x256 -> N/K tiles in 256-multiples; M in 8-multiples.
    tm_e = min(tm, _round_up(Bn, 8))
    tn_e = min(tn, _round_up(dout, 128))
    tk_e = min(tk, _round_up(din, 128))
    Mp = _round_up(Bn, tm_e)
    Np = _round_up(dout, tn_e)
    Kp = _round_up(din, tk_e)
    nc_pad = _round_up(num_class, 128)          # lane-dense LoRA class axis

    # --- glue: top-k class selection -> alpha-weighted class mask over cols 0..num_class-1.
    # (rank identical gathered outer products == weight rank; rank * scaling == alpha.)
    _, topk_idx = lax.top_k(pseudo_index, top_k)                                   # [B, top_k]
    mask = float(alpha) * jax.nn.one_hot(topk_idx, nc_pad, dtype=jnp.float32).sum(axis=1)

    # --- pad + cast operands. Weights are frozen; in a real model these pads/casts are hoisted
    #     out of the step function and paid once, not per call.
    xp = jnp.zeros((Mp, Kp), compute_dtype).at[:Bn, :din].set(x.astype(compute_dtype))
    wp = jnp.zeros((Np, Kp), compute_dtype).at[:dout, :din].set(weight.astype(compute_dtype))
    ap = jnp.zeros((nc_pad, Kp), compute_dtype).at[:num_class, :din].set(
        lora_A[:num_class].astype(compute_dtype))
    bp = jnp.zeros((Np, nc_pad), compute_dtype).at[:dout, :num_class].set(
        lora_B[:, :num_class].astype(compute_dtype))
    maskp = jnp.zeros((Mp, nc_pad), jnp.float32).at[:Bn].set(mask)
    bias2 = jnp.zeros((1, Np), jnp.float32).at[0, :dout].set(2.0 * bias)  # double bias, folded

    grid = (Mp // tm_e, Np // tn_e, Kp // tk_e)

    out = pl.pallas_call(
        _calora_kernel,
        out_shape=jax.ShapeDtypeStruct((Mp, Np), jnp.float32),
        grid_spec=pltpu.PrefetchScalarGridSpec(
            num_scalar_prefetch=0,
            grid=grid,
            in_specs=[
                pl.BlockSpec((tm_e, tk_e), lambda i, j, k: (i, k)),     # x
                pl.BlockSpec((tn_e, tk_e), lambda i, j, k: (j, k)),     # W  [Dout, Din]
                pl.BlockSpec((nc_pad, tk_e), lambda i, j, k: (0, k)),   # lora_A class rows
                pl.BlockSpec((tn_e, nc_pad), lambda i, j, k: (j, 0)),   # lora_B class cols
                pl.BlockSpec((tm_e, nc_pad), lambda i, j, k: (i, 0)),   # alpha-weighted mask
                pl.BlockSpec((1, tn_e), lambda i, j, k: (0, j)),        # 2 * bias
            ],
            out_specs=pl.BlockSpec((tm_e, tn_e), lambda i, j, k: (i, j)),
            scratch_shapes=[pltpu.VMEM((tm_e, tn_e), jnp.float32),
                            pltpu.VMEM((tm_e, nc_pad), jnp.float32)],
        ),
        compiler_params=pltpu.CompilerParams(
            # M/N tiles are independent -> megacore-parallel on v7x; K is the reduction.
            dimension_semantics=("parallel", "parallel", "arbitrary"),
            # Explicit scoped VMEM; double-buffered working set at these tiles is only a few
            # MiB, and 48 MiB stays under v7x's 64 MiB physical VMEM with headroom.
            vmem_limit_bytes=48 * 1024 * 1024,
        ),
    )(xp, wp, ap, bp, maskp, bias2)

    return out[:Bn, :dout]


def calora_reference(x, weight, bias, lora_A, lora_B, pseudo_index, *,
                     num_class, rank, alpha, top_k):
    """Plain-JAX reference mirroring the PyTorch forward line by line (HIGHEST precision)."""
    Bn, din = x.shape
    dout = weight.shape[0]
    scaling = alpha / rank
    hp = lax.Precision.HIGHEST

    orig = jnp.matmul(x, weight.T, precision=hp) + bias

    _, topk_idx = lax.top_k(pseudo_index, top_k)                       # [B, top_k]
    top_index = jnp.repeat(topk_idx, rank, axis=1).reshape(-1)         # [B*top_k*rank]
    A = lora_A[top_index].reshape(Bn, top_k * rank, din)               # [B, k*r, Din]
    Bm = lora_B[:, top_index].reshape(dout, Bn, top_k * rank)
    Bm = jnp.transpose(Bm, (1, 0, 2))                                  # [B, Dout, k*r]
    delta_W = jnp.einsum('bok,bki->boi', Bm, A, precision=hp)          # [B, Dout, Din]
    lora_out = jnp.einsum('bi,boi->bo', x, delta_W, precision=hp) * scaling
    return orig + lora_out + bias                                      # double bias, as torch


if __name__ == "__main__":
    # Small shapes but a multi-step grid: (Mp/tm, Np/tn, Kp/tk) = (1, 2, 2) at default tiles.
    batch = 128
    in_features = 1024
    out_features = 512
    num_class = 8
    rank = 2
    alpha = 16
    top_k = 4

    key = jax.random.PRNGKey(0)
    k_x, k_w, k_b, k_a, k_lb, k_p = jax.random.split(key, 6)

    x = jax.random.normal(k_x, (batch, in_features), dtype=jnp.float32)
    weight = jax.random.normal(k_w, (out_features, in_features), dtype=jnp.float32) * 0.05
    bias = jax.random.normal(k_b, (out_features,), dtype=jnp.float32) * 0.1

    # lora_A: kaiming-uniform-style bound; lora_B: module inits to zeros, but use small random
    # values so the LoRA path is actually exercised (shapes match __init__).
    bound_a = math.sqrt(6.0 / in_features)
    lora_A = jax.random.uniform(k_a, (num_class * rank, in_features), dtype=jnp.float32,
                                minval=-bound_a, maxval=bound_a)
    lora_B = jax.random.normal(k_lb, (out_features, num_class * rank),
                               dtype=jnp.float32) * 0.02
    pseudo_index = jax.random.normal(k_p, (batch, num_class), dtype=jnp.float32)

    kw = dict(num_class=num_class, rank=rank, alpha=alpha, top_k=top_k)

    ref = calora_reference(x, weight, bias, lora_A, lora_B, pseudo_index, **kw)

    # Primary (optimized) path: bf16 MXU inputs, f32 accumulation.
    out_bf16 = jax.block_until_ready(
        calora_forward(x, weight, bias, lora_A, lora_B, pseudo_index,
                       compute_dtype=jnp.bfloat16, **kw))
    assert out_bf16.shape == (batch, out_features)
    assert jnp.allclose(out_bf16, ref, rtol=5e-2, atol=5e-2), (
        f"bf16 path max abs diff {jnp.max(jnp.abs(out_bf16 - ref))}")

    # Tighter check: compare against a reference whose inputs were also rounded to bf16,
    # isolating accumulation-order error from the dtype-cast error itself.
    q = lambda v: v.astype(jnp.bfloat16).astype(jnp.float32)
    ref_q = calora_reference(q(x), q(weight), bias, q(lora_A), q(lora_B), pseudo_index, **kw)
    assert jnp.allclose(out_bf16, ref_q, rtol=1e-2, atol=1e-2), (
        f"bf16 vs quantized-ref max abs diff {jnp.max(jnp.abs(out_bf16 - ref_q))}")

    # f32 fallback path also compiles/runs (MXU multi-pass); loose check since the MXU pass
    # count for f32 follows the backend's default matmul precision.
    out_f32 = jax.block_until_ready(
        calora_forward(x, weight, bias, lora_A, lora_B, pseudo_index,
                       compute_dtype=jnp.float32, **kw))
    assert jnp.allclose(out_f32, ref, rtol=5e-2, atol=5e-2), (
        f"f32 path max abs diff {jnp.max(jnp.abs(out_f32 - ref))}")

    print("KERNEL_OK")
</pallas_src>

<mosaic_0001>
module attributes {stable_mosaic.version = 11 : i64} {
  func.func @_calora_kernel(%arg0: i32, %arg1: i32, %arg2: i32, %arg3: memref<128x512xbf16, #tpu.memory_space<vmem>>, %arg4: memref<256x512xbf16, #tpu.memory_space<vmem>>, %arg5: memref<128x512xbf16, #tpu.memory_space<vmem>>, %arg6: memref<256x128xbf16, #tpu.memory_space<vmem>>, %arg7: memref<128x128xf32, #tpu.memory_space<vmem>>, %arg8: memref<1x256xf32, #tpu.memory_space<vmem>>, %arg9: memref<128x256xf32, #tpu.memory_space<vmem>>, %arg10: memref<128x256xf32, #tpu.memory_space<vmem>>, %arg11: memref<128x128xf32, #tpu.memory_space<vmem>>) attributes {dimension_semantics = [#tpu.dimension_semantics<parallel>, #tpu.dimension_semantics<parallel>, #tpu.dimension_semantics<arbitrary>], iteration_bounds = array<i64: 1, 2, 2>, scalar_prefetch = 0 : i64, scratch_operands = 2 : i64, tpu.core_type = #tpu.core_type<tc>, window_params = [{transform_indices = @transform_0, window_bounds = array<i64: 128, 512>}, {transform_indices = @transform_1, window_bounds = array<i64: 256, 512>}, {transform_indices = @transform_2, window_bounds = array<i64: 128, 512>}, {transform_indices = @transform_3, window_bounds = array<i64: 256, 128>}, {transform_indices = @transform_4, window_bounds = array<i64: 128, 128>}, {transform_indices = @transform_5, window_bounds = array<i64: 1, 256>}, {transform_indices = @transform_6, window_bounds = array<i64: 128, 256>}]} {
    %c0_i32 = arith.constant 0 : i32
    %0 = arith.cmpi eq, %arg2, %c0_i32 : i32
    %1 = arith.extui %0 : i1 to i32
    %c0_i32_0 = arith.constant 0 : i32
    %2 = arith.cmpi ne, %1, %c0_i32_0 : i32
    scf.if %2 {
      %cst_16 = arith.constant 0.000000e+00 : f32
      %17 = vector.broadcast %cst_16 : f32 to vector<128x256xf32>
      %c0_17 = arith.constant 0 : index
      %c0_18 = arith.constant 0 : index
      %18 = vector.load %arg10[%c0_17, %c0_18] : memref<128x256xf32, #tpu.memory_space<vmem>>, vector<128x256xf32>
      tpu.vector_store %arg10[%c0_17, %c0_18], %17 {strides = array<i32>} : memref<128x256xf32, #tpu.memory_space<vmem>>, vector<128x256xf32>,
      %cst_19 = arith.constant 0.000000e+00 : f32
      %19 = vector.broadcast %cst_19 : f32 to vector<128x128xf32>
      %c0_20 = arith.constant 0 : index
      %c0_21 = arith.constant 0 : index
      %20 = vector.load %arg11[%c0_20, %c0_21] : memref<128x128xf32, #tpu.memory_space<vmem>>, vector<128x128xf32>
      tpu.vector_store %arg11[%c0_20, %c0_21], %19 {strides = array<i32>} : memref<128x128xf32, #tpu.memory_space<vmem>>, vector<128x128xf32>,
    } else {
    }
    %c0 = arith.constant 0 : index
    %c0_1 = arith.constant 0 : index
    %3 = vector.load %arg3[%c0, %c0_1] : memref<128x512xbf16, #tpu.memory_space<vmem>>, vector<128x512xbf16>
    %c0_2 = arith.constant 0 : index
    %c0_3 = arith.constant 0 : index
    %4 = vector.load %arg10[%c0_2, %c0_3] : memref<128x256xf32, #tpu.memory_space<vmem>>, vector<128x256xf32>
    %c0_4 = arith.constant 0 : index
    %c0_5 = arith.constant 0 : index
    %5 = vector.load %arg4[%c0_4, %c0_5] : memref<256x512xbf16, #tpu.memory_space<vmem>>, vector<256x512xbf16>
    %cst = arith.constant dense<0.000000e+00> : vector<128x256xf32>
    %6 = tpu.matmul %3, %5, %cst {dimension_numbers = #tpu.dot_dimension_numbers<[1], [1], [0], [0], [0, 0, 1, 0], [], []>} : vector<128x512xbf16>, vector<256x512xbf16>, vector<128x256xf32> -> vector<128x256xf32>
    %7 = arith.addf %4, %6 : vector<128x256xf32>
    %c0_6 = arith.constant 0 : index
    %c0_7 = arith.constant 0 : index
    %8 = vector.load %arg10[%c0_6, %c0_7] : memref<128x256xf32, #tpu.memory_space<vmem>>, vector<128x256xf32>
    tpu.vector_store %arg10[%c0_6, %c0_7], %7 {strides = array<i32>} : memref<128x256xf32, #tpu.memory_space<vmem>>, vector<128x256xf32>,
    %c0_8 = arith.constant 0 : index
    %c0_9 = arith.constant 0 : index
    %9 = vector.load %arg11[%c0_8, %c0_9] : memref<128x128xf32, #tpu.memory_space<vmem>>, vector<128x128xf32>
    %c0_10 = arith.constant 0 : index
    %c0_11 = arith.constant 0 : index
    %10 = vector.load %arg5[%c0_10, %c0_11] : memref<128x512xbf16, #tpu.memory_space<vmem>>, vector<128x512xbf16>
    %cst_12 = arith.constant dense<0.000000e+00> : vector<128x128xf32>
    %11 = tpu.matmul %3, %10, %cst_12 {dimension_numbers = #tpu.dot_dimension_numbers<[1], [1], [0], [0], [0, 0, 1, 0], [], []>} : vector<128x512xbf16>, vector<128x512xbf16>, vector<128x128xf32> -> vector<128x128xf32>
    %12 = arith.addf %9, %11 : vector<128x128xf32>
    %c0_13 = arith.constant 0 : index
    %c0_14 = arith.constant 0 : index
    %13 = vector.load %arg11[%c0_13, %c0_14] : memref<128x128xf32, #tpu.memory_space<vmem>>, vector<128x128xf32>
    tpu.vector_store %arg11[%c0_13, %c0_14], %12 {strides = array<i32>} : memref<128x128xf32, #tpu.memory_space<vmem>>, vector<128x128xf32>,
    %c1_i32 = arith.constant 1 : i32
    %14 = arith.cmpi eq, %arg2, %c1_i32 : i32
    %15 = arith.extui %14 : i1 to i32
    %c0_i32_15 = arith.constant 0 : i32
    %16 = arith.cmpi ne, %15, %c0_i32_15 : i32
    scf.if %16 {
      %c0_16 = arith.constant 0 : index
      %c0_17 = arith.constant 0 : index
      %17 = vector.load %arg7[%c0_16, %c0_17] : memref<128x128xf32, #tpu.memory_space<vmem>>, vector<128x128xf32>
      %c0_18 = arith.constant 0 : index
      %c0_19 = arith.constant 0 : index
      %18 = vector.load %arg11[%c0_18, %c0_19] : memref<128x128xf32, #tpu.memory_space<vmem>>, vector<128x128xf32>
      %19 = arith.mulf %17, %18 : vector<128x128xf32>
      %20 = arith.truncf %19 : vector<128x128xf32> to vector<128x128xbf16>
      %c0_20 = arith.constant 0 : index
      %c0_21 = arith.constant 0 : index
      %21 = vector.load %arg6[%c0_20, %c0_21] : memref<256x128xbf16, #tpu.memory_space<vmem>>, vector<256x128xbf16>
      %cst_22 = arith.constant dense<0.000000e+00> : vector<128x256xf32>
      %22 = tpu.matmul %20, %21, %cst_22 {dimension_numbers = #tpu.dot_dimension_numbers<[1], [1], [0], [0], [0, 0, 1, 0], [], []>} : vector<128x128xbf16>, vector<256x128xbf16>, vector<128x256xf32> -> vector<128x256xf32>
      %c0_23 = arith.constant 0 : index
      %c0_24 = arith.constant 0 : index
      %23 = vector.load %arg10[%c0_23, %c0_24] : memref<128x256xf32, #tpu.memory_space<vmem>>, vector<128x256xf32>
      %24 = arith.addf %23, %22 : vector<128x256xf32>
      %c0_25 = arith.constant 0 : index
      %c0_26 = arith.constant 0 : index
      %25 = vector.load %arg8[%c0_25, %c0_26] : memref<1x256xf32, #tpu.memory_space<vmem>>, vector<1x256xf32>
      %26 = vector.broadcast %25 : vector<1x256xf32> to vector<128x256xf32>
      %27 = arith.addf %24, %26 : vector<128x256xf32>
      %c0_27 = arith.constant 0 : index
      %c0_28 = arith.constant 0 : index
      %28 = vector.load %arg9[%c0_27, %c0_28] : memref<128x256xf32, #tpu.memory_space<vmem>>, vector<128x256xf32>
      tpu.vector_store %arg9[%c0_27, %c0_28], %27 {strides = array<i32>} : memref<128x256xf32, #tpu.memory_space<vmem>>, vector<128x256xf32>,
    } else {
    }
    return
  }
  func.func @transform_0(%arg0: i32, %arg1: i32, %arg2: i32) -> (i32, i32) {
    %c0_i32 = arith.constant 0 : i32
    return %arg0, %arg2 : i32, i32
  }
  func.func @transform_1(%arg0: i32, %arg1: i32, %arg2: i32) -> (i32, i32) {
    %c0_i32 = arith.constant 0 : i32
    return %arg1, %arg2 : i32, i32
  }
  func.func @transform_2(%arg0: i32, %arg1: i32, %arg2: i32) -> (i32, i32) {
    %c0_i32 = arith.constant 0 : i32
    %c0_i32_0 = arith.constant 0 : i32
    return %c0_i32, %arg2 : i32, i32
  }
  func.func @transform_3(%arg0: i32, %arg1: i32, %arg2: i32) -> (i32, i32) {
    %c0_i32 = arith.constant 0 : i32
    %c0_i32_0 = arith.constant 0 : i32
    return %arg1, %c0_i32 : i32, i32
  }
  func.func @transform_4(%arg0: i32, %arg1: i32, %arg2: i32) -> (i32, i32) {
    %c0_i32 = arith.constant 0 : i32
    %c0_i32_0 = arith.constant 0 : i32
    return %arg0, %c0_i32 : i32, i32
  }
  func.func @transform_5(%arg0: i32, %arg1: i32, %arg2: i32) -> (i32, i32) {
    %c0_i32 = arith.constant 0 : i32
    %c0_i32_0 = arith.constant 0 : i32
    return %c0_i32, %arg1 : i32, i32
  }
  func.func @transform_6(%arg0: i32, %arg1: i32, %arg2: i32) -> (i32, i32) {
    %c0_i32 = arith.constant 0 : i32
    return %arg0, %arg1 : i32, i32
  }
}

</mosaic_0001>

<llo_original>
// kernel: tpu_custom_call.1
$region0: #{tpu_custom_call.1}
  #allocation0 [shape = 'u32[]', space=smem, size = 0x4, offset = 0x4, fixed_abs, tag = 'smem constant byte address 0x4 - core index']
  #allocation1 [shape = 'u32[144,128]{1,0:T(1,128)}', space=vmem, size = 0x12000, scoped, tag = 'internal scratch']
  #allocation2 [shape = 'f32[128,256]{1,0:T(8,128)}', space=vmem, size = 0x20000, scoped, tag = 'scratch operand']
  #allocation3 [shape = 'f32[128,128]{1,0:T(8,128)}', space=vmem, size = 0x10000, scoped, tag = 'scratch operand']
  %s0 = inlined_call_operand.hbm [shape: bf16[128,1024], index: 0, kind: input, shape index: {}]
  %s1 = inlined_call_operand.hbm [shape: bf16[512,1024], index: 1, kind: input, shape index: {}]
  %s2 = inlined_call_operand.hbm [shape: bf16[128,1024], index: 2, kind: input, shape index: {}]
  %s3 = inlined_call_operand.hbm [shape: bf16[512,128], index: 3, kind: input, shape index: {}]
  %s4 = inlined_call_operand.hbm [shape: f32[128,128], index: 4, kind: input, shape index: {}]
  %s5 = inlined_call_operand.vmem [shape: f32[1,512], index: 5, kind: input, shape index: {}]
  %s6 = inlined_call_operand.hbm [shape: f32[128,512], index: 6, kind: output, shape index: {}]
  %s7 = sld [smem:[#allocation0]]
  $region85: #{tpu_custom_call.1} parent=0
    _
  %s9 = ssub.s32 1, %s7
  %s10 = scalar_select 0, %s9, %s7
  $region1: #{tpu_custom_call.1} parent=0
    #allocation4 [shape = 'u8[262144]{0}', space=vmem, size = 0x40000, scoped, tag = 'input window, operand 0']
    #allocation5 [shape = 's32[2]{0}', space=sflag, size = 0x8, scoped, tag = 'scoped memory for tpu_custom_call.1']
    #allocation6 [shape = 's32[2]{0}', space=sflag, size = 0x8, scoped, tag = 'scoped memory for tpu_custom_call.1']
    #allocation7 [shape = 'u8[524288]{0}', space=vmem, size = 0x80000, scoped, tag = 'input window, operand 1']
    #allocation8 [shape = 's32[2]{0}', space=sflag, size = 0x8, scoped, tag = 'scoped memory for tpu_custom_call.1']
    #allocation9 [shape = 'u8[262144]{0}', space=vmem, size = 0x40000, scoped, tag = 'input window, operand 2']
    #allocation10 [shape = 'u8[131072]{0}', space=vmem, size = 0x20000, scoped, tag = 'input window, operand 3']
    #allocation11 [shape = 's32[2]{0}', space=sflag, size = 0x8, scoped, tag = 'scoped memory for tpu_custom_call.1']
    #allocation12 [shape = 'u8[65536]{0}', space=vmem, size = 0x10000, scoped, tag = 'input window, operand 4, single buffered']
    #allocation13 [shape = 'u8[262144]{0}', space=vmem, size = 0x40000, scoped, tag = 'output window, operand 0']
    %11 = vsyncpa [#allocation5], 0
    %s12 = scalar_lea.sflag [#allocation5], 1
    %13 = vsyncpa %s12, 0
    %14 = vsyncpa [#allocation8], 0
    %s15 = scalar_lea.sflag [#allocation8], 1
    %16 = vsyncpa %s15, 0
    %17 = vsyncpa [#allocation11], 0
    %s18 = scalar_lea.sflag [#allocation11], 1
    %19 = vsyncpa %s18, 0
    %20 = vsyncpa [#allocation6], 0
    %s21 = scalar_lea.sflag [#allocation6], 1
    %22 = vsyncpa %s21, 0
    loop: start=0, step=1, limit=6
    $region2: #{tpu_custom_call.1} parent=1 // loop_pre_header
      _
    $region3: #{tpu_custom_call.1} parent=1 // loop_header
      %s24 = sphi 0, %s28
      %p25 = scmp.ge.s32.totalorder %s24, 6
      %s31 = sphi 0, %s50
      %s32 = sphi 0, %s46
      %s33 = sphi 0, %s42
      %s34 = sphi 0, %s31
      %s35 = sphi 0, %s32
      %s36 = sphi 0, %s33
      %s37 = sphi 0, %s34
      %s38 = sphi 0, %s35
      %s39 = sphi 0, %s36
      %s55 = sphi 0, %s57
      %s58 = sphi 0, %s55
      %s59 = sphi 0, %s58
      %s75 = sphi 0, %s59
      %s83 = sphi 0, %s85
      %s86 = sphi 0, %s83
      %s87 = sphi 0, %s86
      %s103 = sphi 0, %s87
      %s109 = sphi 0, %s111
      %s112 = sphi 0, %s109
      %s113 = sphi 0, %s112
      %s129 = sphi 0, %s113
      %s135 = sphi 0, %s137
      %s138 = sphi 0, %s135
      %s139 = sphi 0, %s138
      %s155 = sphi 0, %s139
      %s161 = sphi 0, %s163
      %s164 = sphi 0, %s161
      %s165 = sphi 0, %s164
      %s181 = sphi 0, %s165
      %s187 = sphi 0, %s189
      %s190 = sphi 0, %s187
      %s191 = sphi 0, %s190
      %s207 = sphi 0, %s191
      %s215 = sphi 0, %s217
      %s218 = sphi 0, %s215
      %s219 = sphi 0, %s218
      %s235 = sphi 0, %s219
    $region4: #{tpu_custom_call.1} parent=1 // loop_header_branch
      %27 = sbr.rel (%p25) target = $region8
    $region5: #{tpu_custom_call.1} parent=1 // loop_body
      %s29 = ssub.s32 %s24, 1
      %s30 = ssub.s32 %s24, 2
      %s40 = sadd.s32 1, %s33
      %p41 = scmp.ge.s32.totalorder %s40, 2
      %s42 = scalar_select %p41, 0, %s40
      %s43 = sadd.s32 1, %s32
      %s44 = scalar_select %p41, %s43, %s32
      %p45 = scmp.ge.s32.totalorder %s44, 2
      %s46 = scalar_select %p45, 0, %s44
      %s47 = sadd.s32 1, %s31
      %s48 = scalar_select %p45, %s47, %s31
      %p49 = scmp.ge.s32.totalorder %s48, 1
      %s50 = scalar_select %p49, 0, %s48
      %s51 = ssub.s32 %s31, %s50
      %s52 = ssub.s32 %s33, %s42
      %s53 = sor.u32 %s51, %s52
      %p54 = scmp.eq.s32.totalorder %s53, 0
      %s56 = sadd.s32 %s55, 1
      %s57 = scalar_select %p54, %s55, %s56
      %p60 = pneg %p54
      %p61 = scmp.eq.s32.totalorder %s24, 3
      %p62 = por %p60, %p61
      %p63 = scmp.ne.s32.totalorder %s55, %s58
      %p64 = scmp.eq.s32.totalorder %s24, 0
      %p65 = por %p63, %p64
      %p66 = scmp.ne.s32.totalorder %s55, %s58
      %p67 = scmp.eq.s32.totalorder %s29, 3
      %p68 = por %p66, %p67
      %p69 = scmp.ne.s32.totalorder %s58, %s59
      %p70 = scmp.eq.s32.totalorder %s29, 0
      %p71 = por %p69, %p70
      %p72 = scmp.ne.s32.totalorder %s58, %s59
      %p73 = scmp.eq.s32.totalorder %s30, 3
      %p74 = por %p72, %p73
      %p76 = scmp.ne.s32.totalorder %s59, %s75
      %p77 = scmp.eq.s32.totalorder %s30, 0
      %p78 = por %p76, %p77
      %s79 = ssub.s32 %s32, %s46
      %s80 = ssub.s32 %s33, %s42
      %s81 = sor.u32 %s79, %s80
      %p82 = scmp.eq.s32.totalorder %s81, 0
      %s84 = sadd.s32 %s83, 1
      %s85 = scalar_select %p82, %s83, %s84
      %p88 = pneg %p82
      %p89 = scmp.eq.s32.totalorder %s24, 3
      %p90 = por %p88, %p89
      %p91 = scmp.ne.s32.totalorder %s83, %s86
      %p92 = scmp.eq.s32.totalorder %s24, 0
      %p93 = por %p91, %p92
      %p94 = scmp.ne.s32.totalorder %s83, %s86
      %p95 = scmp.eq.s32.totalorder %s29, 3
      %p96 = por %p94, %p95
      %p97 = scmp.ne.s32.totalorder %s86, %s87
      %p98 = scmp.eq.s32.totalorder %s29, 0
      %p99 = por %p97, %p98
      %p100 = scmp.ne.s32.totalorder %s86, %s87
      %p101 = scmp.eq.s32.totalorder %s30, 3
      %p102 = por %p100, %p101
      %p104 = scmp.ne.s32.totalorder %s87, %s103
      %p105 = scmp.eq.s32.totalorder %s30, 0
      %p106 = por %p104, %p105
      %s107 = ssub.s32 %s33, %s42
      %p108 = scmp.eq.s32.totalorder %s107, 0
      %s110 = sadd.s32 %s109, 1
      %s111 = scalar_select %p108, %s109, %s110
      %p114 = pneg %p108
      %p115 = scmp.eq.s32.totalorder %s24, 3
      %p116 = por %p114, %p115
      %p117 = scmp.ne.s32.totalorder %s109, %s112
      %p118 = scmp.eq.s32.totalorder %s24, 0
      %p119 = por %p117, %p118
      %p120 = scmp.ne.s32.totalorder %s109, %s112
      %p121 = scmp.eq.s32.totalorder %s29, 3
      %p122 = por %p120, %p121
      %p123 = scmp.ne.s32.totalorder %s112, %s113
      %p124 = scmp.eq.s32.totalorder %s29, 0
      %p125 = por %p123, %p124
      %p126 = scmp.ne.s32.totalorder %s112, %s113
      %p127 = scmp.eq.s32.totalorder %s30, 3
      %p128 = por %p126, %p127
      %p130 = scmp.ne.s32.totalorder %s113, %s129
      %p131 = scmp.eq.s32.totalorder %s30, 0
      %p132 = por %p130, %p131
      %s133 = ssub.s32 %s32, %s46
      %p134 = scmp.eq.s32.totalorder %s133, 0
      %s136 = sadd.s32 %s135, 1
      %s137 = scalar_select %p134, %s135, %s136
      %p140 = pneg %p134
      %p141 = scmp.eq.s32.totalorder %s24, 3
      %p142 = por %p140, %p141
      %p143 = scmp.ne.s32.totalorder %s135, %s138
      %p144 = scmp.eq.s32.totalorder %s24, 0
      %p145 = por %p143, %p144
      %p146 = scmp.ne.s32.totalorder %s135, %s138
      %p147 = scmp.eq.s32.totalorder %s29, 3
      %p148 = por %p146, %p147
      %p149 = scmp.ne.s32.totalorder %s138, %s139
      %p150 = scmp.eq.s32.totalorder %s29, 0
      %p151 = por %p149, %p150
      %p152 = scmp.ne.s32.totalorder %s138, %s139
      %p153 = scmp.eq.s32.totalorder %s30, 3
      %p154 = por %p152, %p153
      %p156 = scmp.ne.s32.totalorder %s139, %s155
      %p157 = scmp.eq.s32.totalorder %s30, 0
      %p158 = por %p156, %p157
      %s159 = ssub.s32 %s31, %s50
      %p160 = scmp.eq.s32.totalorder %s159, 0
      %s162 = sadd.s32 %s161, 1
      %s163 = scalar_select %p160, %s161, %s162
      %p166 = pneg %p160
      %p167 = scmp.eq.s32.totalorder %s24, 3
      %p168 = por %p166, %p167
      %p169 = scmp.ne.s32.totalorder %s161, %s164
      %p170 = scmp.eq.s32.totalorder %s24, 0
      %p171 = por %p169, %p170
      %p172 = scmp.ne.s32.totalorder %s161, %s164
      %p173 = scmp.eq.s32.totalorder %s29, 3
      %p174 = por %p172, %p173
      %p175 = scmp.ne.s32.totalorder %s164, %s165
      %p176 = scmp.eq.s32.totalorder %s29, 0
      %p177 = por %p175, %p176
      %p178 = scmp.ne.s32.totalorder %s164, %s165
      %p179 = scmp.eq.s32.totalorder %s30, 3
      %p180 = por %p178, %p179
      %p182 = scmp.ne.s32.totalorder %s165, %s181
      %p183 = scmp.eq.s32.totalorder %s30, 0
      %p184 = por %p182, %p183
      %s185 = ssub.s32 %s32, %s46
      %p186 = scmp.eq.s32.totalorder %s185, 0
      %s188 = sadd.s32 %s187, 1
      %s189 = scalar_select %p186, %s187, %s188
      %p192 = pneg %p186
      %p193 = scmp.eq.s32.totalorder %s24, 3
      %p194 = por %p192, %p193
      %p195 = scmp.ne.s32.totalorder %s187, %s190
      %p196 = scmp.eq.s32.totalorder %s24, 0
      %p197 = por %p195, %p196
      %p198 = scmp.ne.s32.totalorder %s187, %s190
      %p199 = scmp.eq.s32.totalorder %s29, 3
      %p200 = por %p198, %p199
      %p201 = scmp.ne.s32.totalorder %s190, %s191
      %p202 = scmp.eq.s32.totalorder %s29, 0
      %p203 = por %p201, %p202
      %p204 = scmp.ne.s32.totalorder %s190, %s191
      %p205 = scmp.eq.s32.totalorder %s30, 3
      %p206 = por %p204, %p205
      %p208 = scmp.ne.s32.totalorder %s191, %s207
      %p209 = scmp.eq.s32.totalorder %s30, 0
      %p210 = por %p208, %p209
      %s211 = ssub.s32 %s31, %s50
      %s212 = ssub.s32 %s32, %s46
      %s213 = sor.u32 %s211, %s212
      %p214 = scmp.eq.s32.totalorder %s213, 0
      %s216 = sadd.s32 %s215, 1
      %s217 = scalar_select %p214, %s215, %s216
      %p220 = pneg %p214
      %p221 = scmp.eq.s32.totalorder %s24, 3
      %p222 = por %p220, %p221
      %p223 = scmp.ne.s32.totalorder %s215, %s218
      %p224 = scmp.eq.s32.totalorder %s24, 0
      %p225 = por %p223, %p224
      %p226 = scmp.ne.s32.totalorder %s215, %s218
      %p227 = scmp.eq.s32.totalorder %s29, 3
      %p228 = por %p226, %p227
      %p229 = scmp.ne.s32.totalorder %s218, %s219
      %p230 = scmp.eq.s32.totalorder %s29, 0
      %p231 = por %p229, %p230
      %p232 = scmp.ne.s32.totalorder %s218, %s219
      %p233 = scmp.eq.s32.totalorder %s30, 3
      %p234 = por %p232, %p233
      %p236 = scmp.ne.s32.totalorder %s219, %s235
      %p237 = scmp.eq.s32.totalorder %s30, 0
      %p238 = por %p236, %p237
      %p239 = scmp.le.s32.totalorder 1, %s24
      %p240 = scmp.lt.s32.totalorder %s24, 5
      %p241 = pnand %p239, %p240
      %p242 = pneg %p241
      // Predicated region
      $region9: #{tpu_custom_call.1} parent=5 // pred_check
        _
      $region10: #{tpu_custom_call.1} parent=5 // pred_check_branch
        %244 = sbr.rel (%p241) target = $region12
      $region11: #{tpu_custom_call.1} parent=5 // pred_region
        %s245 = ssub.s32 %s24, 1
        // Predicated region
        $region13: #{tpu_custom_call.1} parent=11 // pred_check
          %p246 = pneg %p177
        $region14: #{tpu_custom_call.1} parent=11 // pred_check_branch
          %248 = sbr.rel (%p246) target = $region16
        $region15: #{tpu_custom_call.1} parent=11 // pred_region
          %s249 = smul.u32 16, %s34
          %s251 = ssub.s32 2048, 2048
          %252 = vsyncadd [#allocation11], %s251
          %s253 = smul.addr %s249, 128
          %s254 = scalar_lea.hbm %s4, %s253
          %s255 = sshll.u32 [#allocation12], 4
          %s256 = int_to_ptr.vmem [resolvable:$true] %s255
          %261 = dma.hbm_to_vmem [thread:$0]  %s254, 2048, %s256, [#allocation11], 128, 128, 8
        $region16: #{tpu_custom_call.1} parent=11 // pred_fallthru
          _
      $region12: #{tpu_custom_call.1} parent=5 // pred_fallthru
        _
      %p262 = scmp.lt.s32.totalorder %s24, 4
      // Predicated region
      $region17: #{tpu_custom_call.1} parent=5 // pred_check
        %p263 = pneg %p262
      $region18: #{tpu_custom_call.1} parent=5 // pred_check_branch
        %265 = sbr.rel (%p263) target = $region20
      $region19: #{tpu_custom_call.1} parent=5 // pred_region
        // Predicated region
        $region21: #{tpu_custom_call.1} parent=19 // pred_check
          %p266 = pneg %p65
        $region22: #{tpu_custom_call.1} parent=19 // pred_check_branch
          %268 = sbr.rel (%p266) target = $region24
        $region23: #{tpu_custom_call.1} parent=19 // pred_region
          %s269 = sand.u32 %s55, 1
          %s270 = scalar_lea.sflag [#allocation5], %s269
          %s271 = sand.u32 %s55, 1
          %s272 = smul.addr %s271, 256
          %s273 = scalar_lea.vmem [#allocation4], %s272
          %s274 = smul.u32 16, %s31
          %s275 = smul.u32 4, %s33
          %s277 = ssub.s32 4096, 4096
          %278 = vsyncadd %s270, %s277
          %s279 = smul.addr %s274, 8
          %s280 = sadd.s32 %s275, %s279
          %s281 = smul.addr %s280, 64
          %s282 = scalar_lea.hbm %s0, %s281
          %s283 = sshll.u32 %s273, 4
          %s284 = int_to_ptr.vmem [resolvable:$true] %s283
          %289 = dma.hbm_to_vmem [thread:$0]  %s282, 4096, %s284, %s270, 512, 256, 16
        $region24: #{tpu_custom_call.1} parent=19 // pred_fallthru
          _
        // Predicated region
        $region25: #{tpu_custom_call.1} parent=19 // pred_check
          %p290 = pneg %p93
        $region26: #{tpu_custom_call.1} parent=19 // pred_check_branch
          %292 = sbr.rel (%p290) target = $region28
        $region27: #{tpu_custom_call.1} parent=19 // pred_region
          %s293 = sand.u32 %s24, 1
          %s294 = scalar_lea.sflag [#allocation8], %s293
          %s295 = sand.u32 %s83, 1
          %s296 = smul.addr %s295, 512
          %s297 = scalar_lea.vmem [#allocation7], %s296
          %s298 = smul.u32 32, %s32
          %s299 = smul.u32 4, %s33
          %s301 = ssub.s32 8192, 8192
          %302 = vsyncadd %s294, %s301
          %s303 = smul.addr %s298, 8
          %s304 = sadd.s32 %s299, %s303
          %s305 = smul.addr %s304, 64
          %s306 = scalar_lea.hbm %s1, %s305
          %s307 = sshll.u32 %s297, 4
          %s308 = int_to_ptr.vmem [resolvable:$true] %s307
          %313 = dma.hbm_to_vmem [thread:$0]  %s306, 8192, %s308, %s294, 512, 256, 16
        $region28: #{tpu_custom_call.1} parent=19 // pred_fallthru
          _
        // Predicated region
        $region29: #{tpu_custom_call.1} parent=19 // pred_check
          %p314 = pneg %p119
        $region30: #{tpu_custom_call.1} parent=19 // pred_check_branch
          %316 = sbr.rel (%p314) target = $region32
        $region31: #{tpu_custom_call.1} parent=19 // pred_region
          %s317 = sand.u32 %s24, 1
          %s318 = scalar_lea.sflag [#allocation8], %s317
          %s319 = sand.u32 %s109, 1
          %s320 = smul.addr %s319, 256
          %s321 = scalar_lea.vmem [#allocation9], %s320
          %s322 = smul.u32 4, %s33
          %s324 = ssub.s32 4096, 4096
          %325 = vsyncadd %s318, %s324
          %s326 = smul.addr %s322, 64
          %s327 = scalar_lea.hbm %s2, %s326
          %s328 = sshll.u32 %s321, 4
          %s329 = int_to_ptr.vmem [resolvable:$true] %s328
          %334 = dma.hbm_to_vmem [thread:$0]  %s327, 4096, %s329, %s318, 512, 256, 16
        $region32: #{tpu_custom_call.1} parent=19 // pred_fallthru
          _
        // Predicated region
        $region33: #{tpu_custom_call.1} parent=19 // pred_check
          %p335 = pneg %p145
        $region34: #{tpu_custom_call.1} parent=19 // pred_check_branch
          %337 = sbr.rel (%p335) target = $region36
        $region35: #{tpu_custom_call.1} parent=19 // pred_region
          %s338 = sand.u32 %s24, 1
          %s339 = scalar_lea.sflag [#allocation11], %s338
          %s340 = sand.u32 %s135, 1
          %s341 = smul.addr %s340, 128
          %s342 = scalar_lea.vmem [#allocation10], %s341
          %s343 = smul.u32 32, %s32
          %s345 = ssub.s32 2048, 2048
          %346 = vsyncadd %s339, %s345
          %s347 = smul.addr %s343, 64
          %s348 = scalar_lea.hbm %s3, %s347
          %s349 = sshll.u32 %s342, 4
          %s350 = int_to_ptr.vmem [resolvable:$true] %s349
          %355 = dma.hbm_to_vmem [thread:$0]  %s348, 2048, %s350, %s339, 64, 64, 4
        $region36: #{tpu_custom_call.1} parent=19 // pred_fallthru
          _
        // Predicated region
        $region37: #{tpu_custom_call.1} parent=19 // pred_check
          %p356 = pneg %p197
        $region38: #{tpu_custom_call.1} parent=19 // pred_check_branch
          %358 = sbr.rel (%p356) target = $region40
        $region39: #{tpu_custom_call.1} parent=19 // pred_region
          %s359 = smul.u32 2, %s32
          %p360 = scmp.lt.s32.totalorder %s359, 3
          %s361 = scalar_select %p360, %s359, 3
          %s362 = scalar_lea.vmem %s5, %s361
          %s363 = smul.u32 2, %s32
        $region40: #{tpu_custom_call.1} parent=19 // pred_fallthru
          _
      $region20: #{tpu_custom_call.1} parent=5 // pred_fallthru
        _
      %p364 = scmp.le.s32.totalorder 1, %s24
      %p365 = scmp.lt.s32.totalorder %s24, 5
      %p366 = pnand %p364, %p365
      %p367 = pneg %p366
      // Predicated region
      $region41: #{tpu_custom_call.1} parent=5 // pred_check
        _
      $region42: #{tpu_custom_call.1} parent=5 // pred_check_branch
        %369 = sbr.rel (%p366) target = $region44
      $region43: #{tpu_custom_call.1} parent=5 // pred_region
        %s370 = ssub.s32 %s24, 1
        %s371 = sand.u32 %s58, 1
        %s372 = scalar_lea.sflag [#allocation5], %s371
        %s373 = sand.u32 %s58, 1
        %s374 = smul.addr %s373, 256
        %s375 = scalar_lea.vmem [#allocation4], %s374
        // Predicated region
        $region45: #{tpu_custom_call.1} parent=43 // pred_check
          %p376 = pneg %p71
        $region46: #{tpu_custom_call.1} parent=43 // pred_check_branch
          %378 = sbr.rel (%p376) target = $region48
        $region47: #{tpu_custom_call.1} parent=43 // pred_region
          %379 = dma.done %s372, 4096
        $region48: #{tpu_custom_call.1} parent=43 // pred_fallthru
          _
        %s380 = sand.u32 %s29, 1
        %s381 = scalar_lea.sflag [#allocation8], %s380
        %s382 = sand.u32 %s86, 1
        %s383 = smul.addr %s382, 512
        %s384 = scalar_lea.vmem [#allocation7], %s383
        // Predicated region
        $region49: #{tpu_custom_call.1} parent=43 // pred_check
          %p385 = pneg %p99
        $region50: #{tpu_custom_call.1} parent=43 // pred_check_branch
          %387 = sbr.rel (%p385) target = $region52
        $region51: #{tpu_custom_call.1} parent=43 // pred_region
          %388 = dma.done %s381, 8192
        $region52: #{tpu_custom_call.1} parent=43 // pred_fallthru
          _
        %s389 = sand.u32 %s29, 1
        %s390 = scalar_lea.sflag [#allocation8], %s389
        %s391 = sand.u32 %s112, 1
        %s392 = smul.addr %s391, 256
        %s393 = scalar_lea.vmem [#allocation9], %s392
        // Predicated region
        $region53: #{tpu_custom_call.1} parent=43 // pred_check
          %p394 = pneg %p125
        $region54: #{tpu_custom_call.1} parent=43 // pred_check_branch
          %396 = sbr.rel (%p394) target = $region56
        $region55: #{tpu_custom_call.1} parent=43 // pred_region
          %397 = dma.done %s390, 4096
        $region56: #{tpu_custom_call.1} parent=43 // pred_fallthru
          _
        %s398 = sand.u32 %s29, 1
        %s399 = scalar_lea.sflag [#allocation11], %s398
        %s400 = sand.u32 %s138, 1
        %s401 = smul.addr %s400, 128
        %s402 = scalar_lea.vmem [#allocation10], %s401
        // Predicated region
        $region57: #{tpu_custom_call.1} parent=43 // pred_check
          %p403 = pneg %p151
        $region58: #{tpu_custom_call.1} parent=43 // pred_check_branch
          %405 = sbr.rel (%p403) target = $region60
        $region59: #{tpu_custom_call.1} parent=43 // pred_region
          %406 = dma.done %s399, 2048
        $region60: #{tpu_custom_call.1} parent=43 // pred_fallthru
          _
        // Predicated region
        $region61: #{tpu_custom_call.1} parent=43 // pred_check
          %p407 = pneg %p177
        $region62: #{tpu_custom_call.1} parent=43 // pred_check_branch
          %409 = sbr.rel (%p407) target = $region64
        $region63: #{tpu_custom_call.1} parent=43 // pred_region
          %410 = dma.done [#allocation11], 2048
        $region64: #{tpu_custom_call.1} parent=43 // pred_fallthru
          _
        %s411 = sand.u32 %s58, 1
        %s412 = scalar_lea.sflag [#allocation5], %s411
        %s413 = sand.u32 %s58, 1
        %s414 = smul.addr %s413, 256
        %s415 = scalar_lea.vmem [#allocation4], %s414
        %p416 = pneg %p71
        %p417 = pneg %p68
        %s418 = sand.u32 %s29, 1
        %s419 = scalar_lea.sflag [#allocation8], %s418
        %s420 = sand.u32 %s86, 1
        %s421 = smul.addr %s420, 512
        %s422 = scalar_lea.vmem [#allocation7], %s421
        %p423 = pneg %p99
        %p424 = pneg %p96
        %s425 = sand.u32 %s29, 1
        %s426 = scalar_lea.sflag [#allocation8], %s425
        %s427 = sand.u32 %s112, 1
        %s428 = smul.addr %s427, 256
        %s429 = scalar_lea.vmem [#allocation9], %s428
        %p430 = pneg %p125
        %p431 = pneg %p122
        %s432 = sand.u32 %s29, 1
        %s433 = scalar_lea.sflag [#allocation11], %s432
        %s434 = sand.u32 %s138, 1
        %s435 = smul.addr %s434, 128
        %s436 = scalar_lea.vmem [#allocation10], %s435
        %p437 = pneg %p151
        %p438 = pneg %p148
        %p439 = pneg %p177
        %p440 = pneg %p174
        %s441 = smul.u32 2, %s35
        %p442 = scmp.lt.s32.totalorder %s441, 3
        %s443 = scalar_select %p442, %s441, 3
        %s444 = scalar_lea.vmem %s5, %s443
        %p445 = pneg %p203
        %p446 = pneg %p200
        %p447 = pneg %p231
        %p448 = pneg %p228
        %s449 = sand.u32 %s218, 1
        %s450 = scalar_lea.sflag [#allocation6], %s449
        %s451 = sand.u32 %s218, 1
        %s452 = smul.addr %s451, 256
        %s453 = scalar_lea.vmem [#allocation13], %s452
        %s454 = smul.u32 16, %s34
        %s455 = smul.u32 4, %s36
        %s456 = smul.u32 32, %s35
        %s457 = smul.u32 4, %s36
        %s458 = smul.u32 4, %s36
        %s459 = smul.u32 32, %s35
        %s460 = smul.u32 16, %s34
        %s461 = smul.u32 2, %s35
        %p462 = scmp.lt.s32.totalorder %s461, 3
        %s463 = scalar_select %p462, %s461, 3
        %s464 = scalar_lea.vmem %s5, %s463
        %s465 = smul.u32 2, %s35
        %s466 = smul.u32 16, %s34
        %s467 = smul.u32 2, %s35
        %p469 = scmp.eq.s32.totalorder %s36, 0
        // Predicated region
        $region65: #{tpu_custom_call.1} parent=43 // pred_check
          %p470 = pneg %p469
        $region66: #{tpu_custom_call.1} parent=43 // pred_check_branch
          %472 = sbr.rel (%p470) target = $region68
        $region67: #{tpu_custom_call.1} parent=43 // pred_region
          %473 = vst [vmem:[#allocation2] sm:$0xff] 0.0
          %474 = vst [vmem:[#allocation2 + $0x8] sm:$0xff] 0.0
          %475 = vst [vmem:[#allocation2 + $0x10] sm:$0xff] 0.0
          %476 = vst [vmem:[#allocation2 + $0x18] sm:$0xff] 0.0
          %477 = vst [vmem:[#allocation2 + $0x20] sm:$0xff] 0.0
          %478 = vst [vmem:[#allocation2 + $0x28] sm:$0xff] 0.0
          %479 = vst [vmem:[#allocation2 + $0x30] sm:$0xff] 0.0
          %480 = vst [vmem:[#allocation2 + $0x38] sm:$0xff] 0.0
          %481 = vst [vmem:[#allocation2 + $0x40] sm:$0xff] 0.0
          %482 = vst [vmem:[#allocation2 + $0x48] sm:$0xff] 0.0
          %483 = vst [vmem:[#allocation2 + $0x50] sm:$0xff] 0.0
          %484 = vst [vmem:[#allocation2 + $0x58] sm:$0xff] 0.0
          %485 = vst [vmem:[#allocation2 + $0x60] sm:$0xff] 0.0
          %486 = vst [vmem:[#allocation2 + $0x68] sm:$0xff] 0.0
          %487 = vst [vmem:[#allocation2 + $0x70] sm:$0xff] 0.0
          %488 = vst [vmem:[#allocation2 + $0x78] sm:$0xff] 0.0
          %489 = vst [vmem:[#allocation2 + $0x80] sm:$0xff] 0.0
          %490 = vst [vmem:[#allocation2 + $0x88] sm:$0xff] 0.0
          %491 = vst [vmem:[#allocation2 + $0x90] sm:$0xff] 0.0
          %492 = vst [vmem:[#allocation2 + $0x98] sm:$0xff] 0.0
          %493 = vst [vmem:[#allocation2 + $0xa0] sm:$0xff] 0.0
          %494 = vst [vmem:[#allocation2 + $0xa8] sm:$0xff] 0.0
          %495 = vst [vmem:[#allocation2 + $0xb0] sm:$0xff] 0.0
          %496 = vst [vmem:[#allocation2 + $0xb8] sm:$0xff] 0.0
          %497 = vst [vmem:[#allocation2 + $0xc0] sm:$0xff] 0.0
          %498 = vst [vmem:[#allocation2 + $0xc8] sm:$0xff] 0.0
          %499 = vst [vmem:[#allocation2 + $0xd0] sm:$0xff] 0.0
          %500 = vst [vmem:[#allocation2 + $0xd8] sm:$0xff] 0.0
          %501 = vst [vmem:[#allocation2 + $0xe0] sm:$0xff] 0.0
          %502 = vst [vmem:[#allocation2 + $0xe8] sm:$0xff] 0.0
          %503 = vst [vmem:[#allocation2 + $0xf0] sm:$0xff] 0.0
          %504 = vst [vmem:[#allocation2 + $0xf8] sm:$0xff] 0.0
          %505 = vst [vmem:[#allocation3] sm:$0xff] 0.0
          %506 = vst [vmem:[#allocation3 + $0x8] sm:$0xff] 0.0
          %507 = vst [vmem:[#allocation3 + $0x10] sm:$0xff] 0.0
          %508 = vst [vmem:[#allocation3 + $0x18] sm:$0xff] 0.0
          %509 = vst [vmem:[#allocation3 + $0x20] sm:$0xff] 0.0
          %510 = vst [vmem:[#allocation3 + $0x28] sm:$0xff] 0.0
          %511 = vst [vmem:[#allocation3 + $0x30] sm:$0xff] 0.0
          %512 = vst [vmem:[#allocation3 + $0x38] sm:$0xff] 0.0
          %513 = vst [vmem:[#allocation3 + $0x40] sm:$0xff] 0.0
          %514 = vst [vmem:[#allocation3 + $0x48] sm:$0xff] 0.0
          %515 = vst [vmem:[#allocation3 + $0x50] sm:$0xff] 0.0
          %516 = vst [vmem:[#allocation3 + $0x58] sm:$0xff] 0.0
          %517 = vst [vmem:[#allocation3 + $0x60] sm:$0xff] 0.0
          %518 = vst [vmem:[#allocation3 + $0x68] sm:$0xff] 0.0
          %519 = vst [vmem:[#allocation3 + $0x70] sm:$0xff] 0.0
          %520 = vst [vmem:[#allocation3 + $0x78] sm:$0xff] 0.0
        $region68: #{tpu_custom_call.1} parent=43 // pred_fallthru
          _
        %v521 = vld [vmem:[%s375] sm:$0xff]
        %v522 = vld [vmem:[%s375 + $0x8] sm:$0xff]
        %v523 = vld [vmem:[%s375 + $0x10] sm:$0xff]
        %v524 = vld [vmem:[%s375 + $0x18] sm:$0xff]
        %v525 = vld [vmem:[%s375 + $0x20] sm:$0xff]
        %v526 = vld [vmem:[%s375 + $0x28] sm:$0xff]
        %v527 = vld [vmem:[%s375 + $0x30] sm:$0xff]
        %v528 = vld [vmem:[%s375 + $0x38] sm:$0xff]
        %v529 = vld [vmem:[%s375 + $0x40] sm:$0xff]
        %v530 = vld [vmem:[%s375 + $0x48] sm:$0xff]
        %v531 = vld [vmem:[%s375 + $0x50] sm:$0xff]
        %v532 = vld [vmem:[%s375 + $0x58] sm:$0xff]
        %v533 = vld [vmem:[%s375 + $0x60] sm:$0xff]
        %v534 = vld [vmem:[%s375 + $0x68] sm:$0xff]
        %v535 = vld [vmem:[%s375 + $0x70] sm:$0xff]
        %v536 = vld [vmem:[%s375 + $0x78] sm:$0xff]
        %v537 = vld [vmem:[%s375 + $0x80] sm:$0xff]
        %v538 = vld [vmem:[%s375 + $0x88] sm:$0xff]
        %v539 = vld [vmem:[%s375 + $0x90] sm:$0xff]
        %v540 = vld [vmem:[%s375 + $0x98] sm:$0xff]
        %v541 = vld [vmem:[%s375 + $0xa0] sm:$0xff]
        %v542 = vld [vmem:[%s375 + $0xa8] sm:$0xff]
        %v543 = vld [vmem:[%s375 + $0xb0] sm:$0xff]
        %v544 = vld [vmem:[%s375 + $0xb8] sm:$0xff]
        %v545 = vld [vmem:[%s375 + $0xc0] sm:$0xff]
        %v546 = vld [vmem:[%s375 + $0xc8] sm:$0xff]
        %v547 = vld [vmem:[%s375 + $0xd0] sm:$0xff]
        %v548 = vld [vmem:[%s375 + $0xd8] sm:$0xff]
        %v549 = vld [vmem:[%s375 + $0xe0] sm:$0xff]
        %v550 = vld [vmem:[%s375 + $0xe8] sm:$0xff]
        %v551 = vld [vmem:[%s375 + $0xf0] sm:$0xff]
        %v552 = vld [vmem:[%s375 + $0xf8] sm:$0xff]
        %v553 = vld [vmem:[#allocation2] sm:$0xff]
        %v554 = vld [vmem:[#allocation2 + $0x8] sm:$0xff]
        %v555 = vld [vmem:[#allocation2 + $0x10] sm:$0xff]
        %v556 = vld [vmem:[#allocation2 + $0x18] sm:$0xff]
        %v557 = vld [vmem:[#allocation2 + $0x20] sm:$0xff]
        %v558 = vld [vmem:[#allocation2 + $0x28] sm:$0xff]
        %v559 = vld [vmem:[#allocation2 + $0x30] sm:$0xff]
        %v560 = vld [vmem:[#allocation2 + $0x38] sm:$0xff]
        %v561 = vld [vmem:[#allocation2 + $0x40] sm:$0xff]
        %v562 = vld [vmem:[#allocation2 + $0x48] sm:$0xff]
        %v563 = vld [vmem:[#allocation2 + $0x50] sm:$0xff]
        %v564 = vld [vmem:[#allocation2 + $0x58] sm:$0xff]
        %v565 = vld [vmem:[#allocation2 + $0x60] sm:$0xff]
        %v566 = vld [vmem:[#allocation2 + $0x68] sm:$0xff]
        %v567 = vld [vmem:[#allocation2 + $0x70] sm:$0xff]
        %v568 = vld [vmem:[#allocation2 + $0x78] sm:$0xff]
        %v569 = vld [vmem:[#allocation2 + $0x80] sm:$0xff]
        %v570 = vld [vmem:[#allocation2 + $0x88] sm:$0xff]
        %v571 = vld [vmem:[#allocation2 + $0x90] sm:$0xff]
        %v572 = vld [vmem:[#allocation2 + $0x98] sm:$0xff]
        %v573 = vld [vmem:[#allocation2 + $0xa0] sm:$0xff]
        %v574 = vld [vmem:[#allocation2 + $0xa8] sm:$0xff]
        %v575 = vld [vmem:[#allocation2 + $0xb0] sm:$0xff]
        %v576 = vld [vmem:[#allocation2 + $0xb8] sm:$0xff]
        %v577 = vld [vmem:[#allocation2 + $0xc0] sm:$0xff]
        %v578 = vld [vmem:[#allocation2 + $0xc8] sm:$0xff]
        %v579 = vld [vmem:[#allocation2 + $0xd0] sm:$0xff]
        %v580 = vld [vmem:[#allocation2 + $0xd8] sm:$0xff]
        %v581 = vld [vmem:[#allocation2 + $0xe0] sm:$0xff]
        %v582 = vld [vmem:[#allocation2 + $0xe8] sm:$0xff]
        %v583 = vld [vmem:[#allocation2 + $0xf0] sm:$0xff]
        %v584 = vld [vmem:[#allocation2 + $0xf8] sm:$0xff]
        %v585 = vld [vmem:[%s384] sm:$0xff]
        %v586 = vld [vmem:[%s384 + $0x8] sm:$0xff]
        %v587 = vld [vmem:[%s384 + $0x10] sm:$0xff]
        %v588 = vld [vmem:[%s384 + $0x18] sm:$0xff]
        %v589 = vld [vmem:[%s384 + $0x20] sm:$0xff]
        %v590 = vld [vmem:[%s384 + $0x28] sm:$0xff]
        %v591 = vld [vmem:[%s384 + $0x30] sm:$0xff]
        %v592 = vld [vmem:[%s384 + $0x38] sm:$0xff]
        %v593 = vld [vmem:[%s384 + $0x40] sm:$0xff]
        %v594 = vld [vmem:[%s384 + $0x48] sm:$0xff]
        %v595 = vld [vmem:[%s384 + $0x50] sm:$0xff]
        %v596 = vld [vmem:[%s384 + $0x58] sm:$0xff]
        %v597 = vld [vmem:[%s384 + $0x60] sm:$0xff]
        %v598 = vld [vmem:[%s384 + $0x68] sm:$0xff]
        %v599 = vld [vmem:[%s384 + $0x70] sm:$0xff]
        %v600 = vld [vmem:[%s384 + $0x78] sm:$0xff]
        %v601 = vld [vmem:[%s384 + $0x80] sm:$0xff]
        %v602 = vld [vmem:[%s384 + $0x88] sm:$0xff]
        %v603 = vld [vmem:[%s384 + $0x90] sm:$0xff]
        %v604 = vld [vmem:[%s384 + $0x98] sm:$0xff]
        %v605 = vld [vmem:[%s384 + $0xa0] sm:$0xff]
        %v606 = vld [vmem:[%s384 + $0xa8] sm:$0xff]
        %v607 = vld [vmem:[%s384 + $0xb0] sm:$0xff]
        %v608 = vld [vmem:[%s384 + $0xb8] sm:$0xff]
        %v609 = vld [vmem:[%s384 + $0xc0] sm:$0xff]
        %v610 = vld [vmem:[%s384 + $0xc8] sm:$0xff]
        %v611 = vld [vmem:[%s384 + $0xd0] sm:$0xff]
        %v612 = vld [vmem:[%s384 + $0xd8] sm:$0xff]
        %v613 = vld [vmem:[%s384 + $0xe0] sm:$0xff]
        %v614 = vld [vmem:[%s384 + $0xe8] sm:$0xff]
        %v615 = vld [vmem:[%s384 + $0xf0] sm:$0xff]
        %v616 = vld [vmem:[%s384 + $0xf8] sm:$0xff]
        %v617 = vld [vmem:[%s384 + $0x100] sm:$0xff]
        %v618 = vld [vmem:[%s384 + $0x108] sm:$0xff]
        %v619 = vld [vmem:[%s384 + $0x110] sm:$0xff]
        %v620 = vld [vmem:[%s384 + $0x118] sm:$0xff]
        %v621 = vld [vmem:[%s384 + $0x120] sm:$0xff]
        %v622 = vld [vmem:[%s384 + $0x128] sm:$0xff]
        %v623 = vld [vmem:[%s384 + $0x130] sm:$0xff]
        %v624 = vld [vmem:[%s384 + $0x138] sm:$0xff]
        %v625 = vld [vmem:[%s384 + $0x140] sm:$0xff]
        %v626 = vld [vmem:[%s384 + $0x148] sm:$0xff]
        %v627 = vld [vmem:[%s384 + $0x150] sm:$0xff]
        %v628 = vld [vmem:[%s384 + $0x158] sm:$0xff]
        %v629 = vld [vmem:[%s384 + $0x160] sm:$0xff]
        %v630 = vld [vmem:[%s384 + $0x168] sm:$0xff]
        %v631 = vld [vmem:[%s384 + $0x170] sm:$0xff]
        %v632 = vld [vmem:[%s384 + $0x178] sm:$0xff]
        %v633 = vld [vmem:[%s384 + $0x180] sm:$0xff]
        %v634 = vld [vmem:[%s384 + $0x188] sm:$0xff]
        %v635 = vld [vmem:[%s384 + $0x190] sm:$0xff]
        %v636 = vld [vmem:[%s384 + $0x198] sm:$0xff]
        %v637 = vld [vmem:[%s384 + $0x1a0] sm:$0xff]
        %v638 = vld [vmem:[%s384 + $0x1a8] sm:$0xff]
        %v639 = vld [vmem:[%s384 + $0x1b0] sm:$0xff]
        %v640 = vld [vmem:[%s384 + $0x1b8] sm:$0xff]
        %v641 = vld [vmem:[%s384 + $0x1c0] sm:$0xff]
        %v642 = vld [vmem:[%s384 + $0x1c8] sm:$0xff]
        %v643 = vld [vmem:[%s384 + $0x1d0] sm:$0xff]
        %v644 = vld [vmem:[%s384 + $0x1d8] sm:$0xff]
        %v645 = vld [vmem:[%s384 + $0x1e0] sm:$0xff]
        %v646 = vld [vmem:[%s384 + $0x1e8] sm:$0xff]
        %v647 = vld [vmem:[%s384 + $0x1f0] sm:$0xff]
        %v648 = vld [vmem:[%s384 + $0x1f8] sm:$0xff]
        %v681 = vunpack.c.l.b16 %v521
        %v682 = vunpack.c.h.b16 %v521
        %v683 = vunpack.c.l.b16 %v522
        %v684 = vunpack.c.h.b16 %v522
        %v685 = vunpack.c.l.b16 %v523
        %v686 = vunpack.c.h.b16 %v523
        %v687 = vunpack.c.l.b16 %v524
        %v688 = vunpack.c.h.b16 %v524
        %v689 = vunpack.c.l.b16 %v525
        %v690 = vunpack.c.h.b16 %v525
        %v691 = vunpack.c.l.b16 %v526
        %v692 = vunpack.c.h.b16 %v526
        %v693 = vunpack.c.l.b16 %v527
        %v694 = vunpack.c.h.b16 %v527
        %v695 = vunpack.c.l.b16 %v528
        %v696 = vunpack.c.h.b16 %v528
        %v697 = vunpack.c.l.b16 %v529
        %v698 = vunpack.c.h.b16 %v529
        %v699 = vunpack.c.l.b16 %v530
        %v700 = vunpack.c.h.b16 %v530
        %v701 = vunpack.c.l.b16 %v531
        %v702 = vunpack.c.h.b16 %v531
        %v703 = vunpack.c.l.b16 %v532
        %v704 = vunpack.c.h.b16 %v532
        %v705 = vunpack.c.l.b16 %v533
        %v706 = vunpack.c.h.b16 %v533
        %v707 = vunpack.c.l.b16 %v534
        %v708 = vunpack.c.h.b16 %v534
        %v709 = vunpack.c.l.b16 %v535
        %v710 = vunpack.c.h.b16 %v535
        %v711 = vunpack.c.l.b16 %v536
        %v712 = vunpack.c.h.b16 %v536
        %v713 = vunpack.c.l.b16 %v537
        %v714 = vunpack.c.h.b16 %v537
        %v715 = vunpack.c.l.b16 %v538
        %v716 = vunpack.c.h.b16 %v538
        %v717 = vunpack.c.l.b16 %v539
        %v718 = vunpack.c.h.b16 %v539
        %v719 = vunpack.c.l.b16 %v540
        %v720 = vunpack.c.h.b16 %v540
        %v721 = vunpack.c.l.b16 %v541
        %v722 = vunpack.c.h.b16 %v541
        %v723 = vunpack.c.l.b16 %v542
        %v724 = vunpack.c.h.b16 %v542
        %v725 = vunpack.c.l.b16 %v543
        %v726 = vunpack.c.h.b16 %v543
        %v727 = vunpack.c.l.b16 %v544
        %v728 = vunpack.c.h.b16 %v544
        %v729 = vunpack.c.l.b16 %v545
        %v730 = vunpack.c.h.b16 %v545
        %v731 = vunpack.c.l.b16 %v546
        %v732 = vunpack.c.h.b16 %v546
        %v733 = vunpack.c.l.b16 %v547
        %v734 = vunpack.c.h.b16 %v547
        %v735 = vunpack.c.l.b16 %v548
        %v736 = vunpack.c.h.b16 %v548
        %v737 = vunpack.c.l.b16 %v549
        %v738 = vunpack.c.h.b16 %v549
        %v739 = vunpack.c.l.b16 %v550
        %v740 = vunpack.c.h.b16 %v550
        %v741 = vunpack.c.l.b16 %v551
        %v742 = vunpack.c.h.b16 %v551
        %v743 = vunpack.c.l.b16 %v552
        %v744 = vunpack.c.h.b16 %v552
        %v745 = vpack.c.b16 %v685, %v681
        %v746 = vpack.c.b16 %v686, %v682
        %v747 = vpack.c.b16 %v687, %v683
        %v748 = vpack.c.b16 %v688, %v684
        %v749 = vpack.c.b16 %v693, %v689
        %v750 = vpack.c.b16 %v694, %v690
        %v751 = vpack.c.b16 %v695, %v691
        %v752 = vpack.c.b16 %v696, %v692
        %v753 = vpack.c.b16 %v701, %v697
        %v754 = vpack.c.b16 %v702, %v698
        %v755 = vpack.c.b16 %v703, %v699
        %v756 = vpack.c.b16 %v704, %v700
        %v757 = vpack.c.b16 %v709, %v705
        %v758 = vpack.c.b16 %v710, %v706
        %v759 = vpack.c.b16 %v711, %v707
        %v760 = vpack.c.b16 %v712, %v708
        %v761 = vpack.c.b16 %v717, %v713
        %v762 = vpack.c.b16 %v718, %v714
        %v763 = vpack.c.b16 %v719, %v715
        %v764 = vpack.c.b16 %v720, %v716
        %v765 = vpack.c.b16 %v725, %v721
        %v766 = vpack.c.b16 %v726, %v722
        %v767 = vpack.c.b16 %v727, %v723
        %v768 = vpack.c.b16 %v728, %v724
        %v769 = vpack.c.b16 %v733, %v729
        %v770 = vpack.c.b16 %v734, %v730
        %v771 = vpack.c.b16 %v735, %v731
        %v772 = vpack.c.b16 %v736, %v732
        %v773 = vpack.c.b16 %v741, %v737
        %v774 = vpack.c.b16 %v742, %v738
        %v775 = vpack.c.b16 %v743, %v739
        %v776 = vpack.c.b16 %v744, %v740
        %v873 = vunpack.c.l.b16 %v585
        %v874 = vunpack.c.h.b16 %v585
        %v875 = vunpack.c.l.b16 %v586
        %v876 = vunpack.c.h.b16 %v586
        %v877 = vunpack.c.l.b16 %v587
        %v878 = vunpack.c.h.b16 %v587
        %v879 = vunpack.c.l.b16 %v588
        %v880 = vunpack.c.h.b16 %v588
        %v881 = vunpack.c.l.b16 %v589
        %v882 = vunpack.c.h.b16 %v589
        %v883 = vunpack.c.l.b16 %v590
        %v884 = vunpack.c.h.b16 %v590
        %v885 = vunpack.c.l.b16 %v591
        %v886 = vunpack.c.h.b16 %v591
        %v887 = vunpack.c.l.b16 %v592
        %v888 = vunpack.c.h.b16 %v592
        %v889 = vunpack.c.l.b16 %v593
        %v890 = vunpack.c.h.b16 %v593
        %v891 = vunpack.c.l.b16 %v594
        %v892 = vunpack.c.h.b16 %v594
        %v893 = vunpack.c.l.b16 %v595
        %v894 = vunpack.c.h.b16 %v595
        %v895 = vunpack.c.l.b16 %v596
        %v896 = vunpack.c.h.b16 %v596
        %v897 = vunpack.c.l.b16 %v597
        %v898 = vunpack.c.h.b16 %v597
        %v899 = vunpack.c.l.b16 %v598
        %v900 = vunpack.c.h.b16 %v598
        %v901 = vunpack.c.l.b16 %v599
        %v902 = vunpack.c.h.b16 %v599
        %v903 = vunpack.c.l.b16 %v600
        %v904 = vunpack.c.h.b16 %v600
        %v905 = vunpack.c.l.b16 %v601
        %v906 = vunpack.c.h.b16 %v601
        %v907 = vunpack.c.l.b16 %v602
        %v908 = vunpack.c.h.b16 %v602
        %v909 = vunpack.c.l.b16 %v603
        %v910 = vunpack.c.h.b16 %v603
        %v911 = vunpack.c.l.b16 %v604
        %v912 = vunpack.c.h.b16 %v604
        %v913 = vunpack.c.l.b16 %v605
        %v914 = vunpack.c.h.b16 %v605
        %v915 = vunpack.c.l.b16 %v606
        %v916 = vunpack.c.h.b16 %v606
        %v917 = vunpack.c.l.b16 %v607
        %v918 = vunpack.c.h.b16 %v607
        %v919 = vunpack.c.l.b16 %v608
        %v920 = vunpack.c.h.b16 %v608
        %v921 = vunpack.c.l.b16 %v609
        %v922 = vunpack.c.h.b16 %v609
        %v923 = vunpack.c.l.b16 %v610
        %v924 = vunpack.c.h.b16 %v610
        %v925 = vunpack.c.l.b16 %v611
        %v926 = vunpack.c.h.b16 %v611
        %v927 = vunpack.c.l.b16 %v612
        %v928 = vunpack.c.h.b16 %v612
        %v929 = vunpack.c.l.b16 %v613
        %v930 = vunpack.c.h.b16 %v613
        %v931 = vunpack.c.l.b16 %v614
        %v932 = vunpack.c.h.b16 %v614
        %v933 = vunpack.c.l.b16 %v615
        %v934 = vunpack.c.h.b16 %v615
        %v935 = vunpack.c.l.b16 %v616
        %v936 = vunpack.c.h.b16 %v616
        %v937 = vunpack.c.l.b16 %v617
        %v938 = vunpack.c.h.b16 %v617
        %v939 = vunpack.c.l.b16 %v618
        %v940 = vunpack.c.h.b16 %v618
        %v941 = vunpack.c.l.b16 %v619
        %v942 = vunpack.c.h.b16 %v619
        %v943 = vunpack.c.l.b16 %v620
        %v944 = vunpack.c.h.b16 %v620
        %v945 = vunpack.c.l.b16 %v621
        %v946 = vunpack.c.h.b16 %v621
        %v947 = vunpack.c.l.b16 %v622
        %v948 = vunpack.c.h.b16 %v622
        %v949 = vunpack.c.l.b16 %v623
        %v950 = vunpack.c.h.b16 %v623
        %v951 = vunpack.c.l.b16 %v624
        %v952 = vunpack.c.h.b16 %v624
        %v953 = vunpack.c.l.b16 %v625
        %v954 = vunpack.c.h.b16 %v625
        %v955 = vunpack.c.l.b16 %v626
        %v956 = vunpack.c.h.b16 %v626
        %v957 = vunpack.c.l.b16 %v627
        %v958 = vunpack.c.h.b16 %v627
        %v959 = vunpack.c.l.b16 %v628
        %v960 = vunpack.c.h.b16 %v628
        %v961 = vunpack.c.l.b16 %v629
        %v962 = vunpack.c.h.b16 %v629
        %v963 = vunpack.c.l.b16 %v630
        %v964 = vunpack.c.h.b16 %v630
        %v965 = vunpack.c.l.b16 %v631
        %v966 = vunpack.c.h.b16 %v631
        %v967 = vunpack.c.l.b16 %v632
        %v968 = vunpack.c.h.b16 %v632
        %v969 = vunpack.c.l.b16 %v633
        %v970 = vunpack.c.h.b16 %v633
        %v971 = vunpack.c.l.b16 %v634
        %v972 = vunpack.c.h.b16 %v634
        %v973 = vunpack.c.l.b16 %v635
        %v974 = vunpack.c.h.b16 %v635
        %v975 = vunpack.c.l.b16 %v636
        %v976 = vunpack.c.h.b16 %v636
        %v977 = vunpack.c.l.b16 %v637
        %v978 = vunpack.c.h.b16 %v637
        %v979 = vunpack.c.l.b16 %v638
        %v980 = vunpack.c.h.b16 %v638
        %v981 = vunpack.c.l.b16 %v639
        %v982 = vunpack.c.h.b16 %v639
        %v983 = vunpack.c.l.b16 %v640
        %v984 = vunpack.c.h.b16 %v640
        %v985 = vunpack.c.l.b16 %v641
        %v986 = vunpack.c.h.b16 %v641
        %v987 = vunpack.c.l.b16 %v642
        %v988 = vunpack.c.h.b16 %v642
        %v989 = vunpack.c.l.b16 %v643
        %v990 = vunpack.c.h.b16 %v643
        %v991 = vunpack.c.l.b16 %v644
        %v992 = vunpack.c.h.b16 %v644
        %v993 = vunpack.c.l.b16 %v645
        %v994 = vunpack.c.h.b16 %v645
        %v995 = vunpack.c.l.b16 %v646
        %v996 = vunpack.c.h.b16 %v646
        %v997 = vunpack.c.l.b16 %v647
        %v998 = vunpack.c.h.b16 %v647
        %v999 = vunpack.c.l.b16 %v648
        %v1000 = vunpack.c.h.b16 %v648
        %v1001 = vpack.c.b16 %v877, %v873
        %v1002 = vpack.c.b16 %v878, %v874
        %v1003 = vpack.c.b16 %v879, %v875
        %v1004 = vpack.c.b16 %v880, %v876
        %v1005 = vpack.c.b16 %v885, %v881
        %v1006 = vpack.c.b16 %v886, %v882
        %v1007 = vpack.c.b16 %v887, %v883
        %v1008 = vpack.c.b16 %v888, %v884
        %v1009 = vpack.c.b16 %v893, %v889
        %v1010 = vpack.c.b16 %v894, %v890
        %v1011 = vpack.c.b16 %v895, %v891
        %v1012 = vpack.c.b16 %v896, %v892
        %v1013 = vpack.c.b16 %v901, %v897
        %v1014 = vpack.c.b16 %v902, %v898
        %v1015 = vpack.c.b16 %v903, %v899
        %v1016 = vpack.c.b16 %v904, %v900
        %v1017 = vpack.c.b16 %v909, %v905
        %v1018 = vpack.c.b16 %v910, %v906
        %v1019 = vpack.c.b16 %v911, %v907
        %v1020 = vpack.c.b16 %v912, %v908
        %v1021 = vpack.c.b16 %v917, %v913
        %v1022 = vpack.c.b16 %v918, %v914
        %v1023 = vpack.c.b16 %v919, %v915
        %v1024 = vpack.c.b16 %v920, %v916
        %v1025 = vpack.c.b16 %v925, %v921
        %v1026 = vpack.c.b16 %v926, %v922
        %v1027 = vpack.c.b16 %v927, %v923
        %v1028 = vpack.c.b16 %v928, %v924
        %v1029 = vpack.c.b16 %v933, %v929
        %v1030 = vpack.c.b16 %v934, %v930
        %v1031 = vpack.c.b16 %v935, %v931
        %v1032 = vpack.c.b16 %v936, %v932
        %v1033 = vpack.c.b16 %v941, %v937
        %v1034 = vpack.c.b16 %v942, %v938
        %v1035 = vpack.c.b16 %v943, %v939
        %v1036 = vpack.c.b16 %v944, %v940
        %v1037 = vpack.c.b16 %v949, %v945
        %v1038 = vpack.c.b16 %v950, %v946
        %v1039 = vpack.c.b16 %v951, %v947
        %v1040 = vpack.c.b16 %v952, %v948
        %v1041 = vpack.c.b16 %v957, %v953
        %v1042 = vpack.c.b16 %v958, %v954
        %v1043 = vpack.c.b16 %v959, %v955
        %v1044 = vpack.c.b16 %v960, %v956
        %v1045 = vpack.c.b16 %v965, %v961
        %v1046 = vpack.c.b16 %v966, %v962
        %v1047 = vpack.c.b16 %v967, %v963
        %v1048 = vpack.c.b16 %v968, %v964
        %v1049 = vpack.c.b16 %v973, %v969
        %v1050 = vpack.c.b16 %v974, %v970
        %v1051 = vpack.c.b16 %v975, %v971
        %v1052 = vpack.c.b16 %v976, %v972
        %v1053 = vpack.c.b16 %v981, %v977
        %v1054 = vpack.c.b16 %v982, %v978
        %v1055 = vpack.c.b16 %v983, %v979
        %v1056 = vpack.c.b16 %v984, %v980
        %v1057 = vpack.c.b16 %v989, %v985
        %v1058 = vpack.c.b16 %v990, %v986
        %v1059 = vpack.c.b16 %v991, %v987
        %v1060 = vpack.c.b16 %v992, %v988
        %v1061 = vpack.c.b16 %v997, %v993
        %v1062 = vpack.c.b16 %v998, %v994
        %v1063 = vpack.c.b16 %v999, %v995
        %v1064 = vpack.c.b16 %v1000, %v996
        %1129 = vmatprep.subr.bf16.mxu0 %v1002
        %1130 = vmatpush1.bf16.xpose.msra.mxu0 %v1001
        %1131 = vmatprep.subr.bf16.mxu0 %v1006
        %1132 = vmatpush1.bf16.xpose.msra.mxu0 %v1005
        %1133 = vmatprep.subr.bf16.mxu0 %v1010
        %1134 = vmatpush1.bf16.xpose.msra.mxu0 %v1009
        %1135 = vmatprep.subr.bf16.mxu0 %v1014
        %1136 = vmatpush1.bf16.xpose.msra.mxu0 %v1013
        %1137 = vmatprep.subr.bf16.mxu0 %v1018
        %1138 = vmatpush1.bf16.xpose.msra.mxu0 %v1017
        %1139 = vmatprep.subr.bf16.mxu0 %v1022
        %1140 = vmatpush1.bf16.xpose.msra.mxu0 %v1021
        %1141 = vmatprep.subr.bf16.mxu0 %v1026
        %1142 = vmatpush1.bf16.xpose.msra.mxu0 %v1025
        %1143 = vmatprep.subr.bf16.mxu0 %v1030
        %1144 = vmatpush1.bf16.xpose.msra.mxu0 %v1029
        %1145 = vmatprep.subr.bf16.mxu0 %v1034
        %1146 = vmatpush1.bf16.xpose.msra.mxu0 %v1033
        %1147 = vmatprep.subr.bf16.mxu0 %v1038
        %1148 = vmatpush1.bf16.xpose.msra.mxu0 %v1037
        %1149 = vmatprep.subr.bf16.mxu0 %v1042
        %1150 = vmatpush1.bf16.xpose.msra.mxu0 %v1041
        %1151 = vmatprep.subr.bf16.mxu0 %v1046
        %1152 = vmatpush1.bf16.xpose.msra.mxu0 %v1045
        %1153 = vmatprep.subr.bf16.mxu0 %v1050
        %1154 = vmatpush1.bf16.xpose.msra.mxu0 %v1049
        %1155 = vmatprep.subr.bf16.mxu0 %v1054
        %1156 = vmatpush1.bf16.xpose.msra.mxu0 %v1053
        %1157 = vmatprep.subr.bf16.mxu0 %v1058
        %1158 = vmatpush1.bf16.xpose.msra.mxu0 %v1057
        %1159 = vmatprep.subr.bf16.mxu0 %v1062
        %1160 = vmatpush1.bf16.xpose.msra.mxu0 %v1061
        %1161 = vmatprep.mubr.bf16.mxu0 %v746
        %1162 = vmatmul.mubr.bf16.gmra.mrb[0].mxu0 %v745
        %v1163 = vpop.f32.mrb[0].mxu0
        %v1164 = vadd.f32 0.0, %v1163
        %v1165 = vpop.f32.mrb[0].mxu0
        %v1166 = vadd.f32 0.0, %v1165
        %v1167 = vpop.f32.mrb[0].mxu0
        %v1168 = vadd.f32 0.0, %v1167
        %v1169 = vpop.f32.mrb[0].mxu0
        %v1170 = vadd.f32 0.0, %v1169
        %1171 = vmatprep.mubr.bf16.mxu0 %v750
        %1172 = vmatmul.mubr.bf16.gmra.mrb[0].mxu0 %v749
        %v1173 = vpop.f32.mrb[0].mxu0
        %v1174 = vadd.f32 0.0, %v1173
        %v1175 = vpop.f32.mrb[0].mxu0
        %v1176 = vadd.f32 0.0, %v1175
        %v1177 = vpop.f32.mrb[0].mxu0
        %v1178 = vadd.f32 0.0, %v1177
        %v1179 = vpop.f32.mrb[0].mxu0
        %v1180 = vadd.f32 0.0, %v1179
        %1181 = vmatprep.mubr.bf16.mxu0 %v754
        %1182 = vmatmul.mubr.bf16.gmra.mrb[0].mxu0 %v753
        %v1183 = vpop.f32.mrb[0].mxu0
        %v1184 = vadd.f32 0.0, %v1183
        %v1185 = vpop.f32.mrb[0].mxu0
        %v1186 = vadd.f32 0.0, %v1185
        %v1187 = vpop.f32.mrb[0].mxu0
        %v1188 = vadd.f32 0.0, %v1187
        %v1189 = vpop.f32.mrb[0].mxu0
        %v1190 = vadd.f32 0.0, %v1189
        %1191 = vmatprep.mubr.bf16.mxu0 %v758
        %1192 = vmatmul.mubr.bf16.gmra.mrb[0].mxu0 %v757
        %v1193 = vpop.f32.mrb[0].mxu0
        %v1194 = vadd.f32 0.0, %v1193
        %v1195 = vpop.f32.mrb[0].mxu0
        %v1196 = vadd.f32 0.0, %v1195
        %v1197 = vpop.f32.mrb[0].mxu0
        %v1198 = vadd.f32 0.0, %v1197
        %v1199 = vpop.f32.mrb[0].mxu0
        %v1200 = vadd.f32 0.0, %v1199
        %1201 = vmatprep.mubr.bf16.mxu0 %v762
        %1202 = vmatmul.mubr.bf16.gmra.mrb[0].mxu0 %v761
        %v1203 = vpop.f32.mrb[0].mxu0
        %v1204 = vadd.f32 0.0, %v1203
        %v1205 = vpop.f32.mrb[0].mxu0
        %v1206 = vadd.f32 0.0, %v1205
        %v1207 = vpop.f32.mrb[0].mxu0
        %v1208 = vadd.f32 0.0, %v1207
        %v1209 = vpop.f32.mrb[0].mxu0
        %v1210 = vadd.f32 0.0, %v1209
        %1211 = vmatprep.mubr.bf16.mxu0 %v766
        %1212 = vmatmul.mubr.bf16.gmra.mrb[0].mxu0 %v765
        %v1213 = vpop.f32.mrb[0].mxu0
        %v1214 = vadd.f32 0.0, %v1213
        %v1215 = vpop.f32.mrb[0].mxu0
        %v1216 = vadd.f32 0.0, %v1215
        %v1217 = vpop.f32.mrb[0].mxu0
        %v1218 = vadd.f32 0.0, %v1217
        %v1219 = vpop.f32.mrb[0].mxu0
        %v1220 = vadd.f32 0.0, %v1219
        %1221 = vmatprep.mubr.bf16.mxu0 %v770
        %1222 = vmatmul.mubr.bf16.gmra.mrb[0].mxu0 %v769
        %v1223 = vpop.f32.mrb[0].mxu0
        %v1224 = vadd.f32 0.0, %v1223
        %v1225 = vpop.f32.mrb[0].mxu0
        %v1226 = vadd.f32 0.0, %v1225
        %v1227 = vpop.f32.mrb[0].mxu0
        %v1228 = vadd.f32 0.0, %v1227
        %v1229 = vpop.f32.mrb[0].mxu0
        %v1230 = vadd.f32 0.0, %v1229
        %1231 = vmatprep.mubr.bf16.mxu0 %v774
        %1232 = vmatmul.mubr.bf16.gmra.mrb[0].mxu0 %v773
        %v1233 = vpop.f32.mrb[0].mxu0
        %v1234 = vadd.f32 0.0, %v1233
        %v1235 = vpop.f32.mrb[0].mxu0
        %v1236 = vadd.f32 0.0, %v1235
        %v1237 = vpop.f32.mrb[0].mxu0
        %v1238 = vadd.f32 0.0, %v1237
        %v1239 = vpop.f32.mrb[0].mxu0
        %v1240 = vadd.f32 0.0, %v1239
        %1241 = vdwg.mxu0
        %1242 = vmatprep.subr.bf16.mxu0 %v1004
        %1243 = vmatpush1.bf16.xpose.msra.mxu0 %v1003
        %1244 = vmatprep.subr.bf16.mxu0 %v1008
        %1245 = vmatpush1.bf16.xpose.msra.mxu0 %v1007
        %1246 = vmatprep.subr.bf16.mxu0 %v1012
        %1247 = vmatpush1.bf16.xpose.msra.mxu0 %v1011
        %1248 = vmatprep.subr.bf16.mxu0 %v1016
        %1249 = vmatpush1.bf16.xpose.msra.mxu0 %v1015
        %1250 = vmatprep.subr.bf16.mxu0 %v1020
        %1251 = vmatpush1.bf16.xpose.msra.mxu0 %v1019
        %1252 = vmatprep.subr.bf16.mxu0 %v1024
        %1253 = vmatpush1.bf16.xpose.msra.mxu0 %v1023
        %1254 = vmatprep.subr.bf16.mxu0 %v1028
        %1255 = vmatpush1.bf16.xpose.msra.mxu0 %v1027
        %1256 = vmatprep.subr.bf16.mxu0 %v1032
        %1257 = vmatpush1.bf16.xpose.msra.mxu0 %v1031
        %1258 = vmatprep.subr.bf16.mxu0 %v1036
        %1259 = vmatpush1.bf16.xpose.msra.mxu0 %v1035
        %1260 = vmatprep.subr.bf16.mxu0 %v1040
        %1261 = vmatpush1.bf16.xpose.msra.mxu0 %v1039
        %1262 = vmatprep.subr.bf16.mxu0 %v1044
        %1263 = vmatpush1.bf16.xpose.msra.mxu0 %v1043
        %1264 = vmatprep.subr.bf16.mxu0 %v1048
        %1265 = vmatpush1.bf16.xpose.msra.mxu0 %v1047
        %1266 = vmatprep.subr.bf16.mxu0 %v1052
        %1267 = vmatpush1.bf16.xpose.msra.mxu0 %v1051
        %1268 = vmatprep.subr.bf16.mxu0 %v1056
        %1269 = vmatpush1.bf16.xpose.msra.mxu0 %v1055
        %1270 = vmatprep.subr.bf16.mxu0 %v1060
        %1271 = vmatpush1.bf16.xpose.msra.mxu0 %v1059
        %1272 = vmatprep.subr.bf16.mxu0 %v1064
        %1273 = vmatpush1.bf16.xpose.msra.mxu0 %v1063
        %1274 = vmatprep.mubr.bf16.mxu0 %v748
        %1275 = vmatmul.mubr.bf16.gmra.mrb[0].mxu0 %v747
        %v1276 = vpop.f32.mrb[0].mxu0
        %v1277 = vadd.f32 %v1164, %v1276
        %v1278 = vpop.f32.mrb[0].mxu0
        %v1279 = vadd.f32 %v1166, %v1278
        %v1280 = vpop.f32.mrb[0].mxu0
        %v1281 = vadd.f32 %v1168, %v1280
        %v1282 = vpop.f32.mrb[0].mxu0
        %v1283 = vadd.f32 %v1170, %v1282
        %1284 = vmatprep.mubr.bf16.mxu0 %v752
        %1285 = vmatmul.mubr.bf16.gmra.mrb[0].mxu0 %v751
        %v1286 = vpop.f32.mrb[0].mxu0
        %v1287 = vadd.f32 %v1174, %v1286
        %v1288 = vpop.f32.mrb[0].mxu0
        %v1289 = vadd.f32 %v1176, %v1288
        %v1290 = vpop.f32.mrb[0].mxu0
        %v1291 = vadd.f32 %v1178, %v1290
        %v1292 = vpop.f32.mrb[0].mxu0
        %v1293 = vadd.f32 %v1180, %v1292
        %1294 = vmatprep.mubr.bf16.mxu0 %v756
        %1295 = vmatmul.mubr.bf16.gmra.mrb[0].mxu0 %v755
        %v1296 = vpop.f32.mrb[0].mxu0
        %v1297 = vadd.f32 %v1184, %v1296
        %v1298 = vpop.f32.mrb[0].mxu0
        %v1299 = vadd.f32 %v1186, %v1298
        %v1300 = vpop.f32.mrb[0].mxu0
        %v1301 = vadd.f32 %v1188, %v1300
        %v1302 = vpop.f32.mrb[0].mxu0
        %v1303 = vadd.f32 %v1190, %v1302
        %1304 = vmatprep.mubr.bf16.mxu0 %v760
        %1305 = vmatmul.mubr.bf16.gmra.mrb[0].mxu0 %v759
        %v1306 = vpop.f32.mrb[0].mxu0
        %v1307 = vadd.f32 %v1194, %v1306
        %v1308 = vpop.f32.mrb[0].mxu0
        %v1309 = vadd.f32 %v1196, %v1308
        %v1310 = vpop.f32.mrb[0].mxu0
        %v1311 = vadd.f32 %v1198, %v1310
        %v1312 = vpop.f32.mrb[0].mxu0
        %v1313 = vadd.f32 %v1200, %v1312
        %1314 = vmatprep.mubr.bf16.mxu0 %v764
        %1315 = vmatmul.mubr.bf16.gmra.mrb[0].mxu0 %v763
        %v1316 = vpop.f32.mrb[0].mxu0
        %v1317 = vadd.f32 %v1204, %v1316
        %v1318 = vpop.f32.mrb[0].mxu0
        %v1319 = vadd.f32 %v1206, %v1318
        %v1320 = vpop.f32.mrb[0].mxu0
        %v1321 = vadd.f32 %v1208, %v1320
        %v1322 = vpop.f32.mrb[0].mxu0
        %v1323 = vadd.f32 %v1210, %v1322
        %1324 = vmatprep.mubr.bf16.mxu0 %v768
        %1325 = vmatmul.mubr.bf16.gmra.mrb[0].mxu0 %v767
        %v1326 = vpop.f32.mrb[0].mxu0
        %v1327 = vadd.f32 %v1214, %v1326
        %v1328 = vpop.f32.mrb[0].mxu0
        %v1329 = vadd.f32 %v1216, %v1328
        %v1330 = vpop.f32.mrb[0].mxu0
        %v1331 = vadd.f32 %v1218, %v1330
        %v1332 = vpop.f32.mrb[0].mxu0
        %v1333 = vadd.f32 %v1220, %v1332
        %1334 = vmatprep.mubr.bf16.mxu0 %v772
        %1335 = vmatmul.mubr.bf16.gmra.mrb[0].mxu0 %v771
        %v1336 = vpop.f32.mrb[0].mxu0
        %v1337 = vadd.f32 %v1224, %v1336
        %v1338 = vpop.f32.mrb[0].mxu0
        %v1339 = vadd.f32 %v1226, %v1338
        %v1340 = vpop.f32.mrb[0].mxu0
        %v1341 = vadd.f32 %v1228, %v1340
        %v1342 = vpop.f32.mrb[0].mxu0
        %v1343 = vadd.f32 %v1230, %v1342
        %1344 = vmatprep.mubr.bf16.mxu0 %v776
        %1345 = vmatmul.mubr.bf16.gmra.mrb[0].mxu0 %v775
        %v1346 = vpop.f32.mrb[0].mxu0
        %v1347 = vadd.f32 %v1234, %v1346
        %v1348 = vpop.f32.mrb[0].mxu0
        %v1349 = vadd.f32 %v1236, %v1348
        %v1350 = vpop.f32.mrb[0].mxu0
        %v1351 = vadd.f32 %v1238, %v1350
        %v1352 = vpop.f32.mrb[0].mxu0
        %v1353 = vadd.f32 %v1240, %v1352
        %1354 = vdwg.mxu0
        %v1355 = vadd.f32 %v553, %v1277
        %v1356 = vadd.f32 %v554, %v1279
        %v1357 = vadd.f32 %v555, %v1281
        %v1358 = vadd.f32 %v556, %v1283
        %v1359 = vadd.f32 %v557, %v1287
        %v1360 = vadd.f32 %v558, %v1289
        %v1361 = vadd.f32 %v559, %v1291
        %v1362 = vadd.f32 %v560, %v1293
        %v1363 = vadd.f32 %v561, %v1297
        %v1364 = vadd.f32 %v562, %v1299
        %v1365 = vadd.f32 %v563, %v1301
        %v1366 = vadd.f32 %v564, %v1303
        %v1367 = vadd.f32 %v565, %v1307
        %v1368 = vadd.f32 %v566, %v1309
        %v1369 = vadd.f32 %v567, %v1311
        %v1370 = vadd.f32 %v568, %v1313
        %v1371 = vadd.f32 %v569, %v1317
        %v1372 = vadd.f32 %v570, %v1319
        %v1373 = vadd.f32 %v571, %v1321
        %v1374 = vadd.f32 %v572, %v1323
        %v1375 = vadd.f32 %v573, %v1327
        %v1376 = vadd.f32 %v574, %v1329
        %v1377 = vadd.f32 %v575, %v1331
        %v1378 = vadd.f32 %v576, %v1333
        %v1379 = vadd.f32 %v577, %v1337
        %v1380 = vadd.f32 %v578, %v1339
        %v1381 = vadd.f32 %v579, %v1341
        %v1382 = vadd.f32 %v580, %v1343
        %v1383 = vadd.f32 %v581, %v1347
        %v1384 = vadd.f32 %v582, %v1349
        %v1385 = vadd.f32 %v583, %v1351
        %v1386 = vadd.f32 %v584, %v1353
        %1387 = vst [vmem:[#allocation2] sm:$0xff] %v1355
        %1388 = vst [vmem:[#allocation2 + $0x8] sm:$0xff] %v1356
        %1389 = vst [vmem:[#allocation2 + $0x10] sm:$0xff] %v1357
        %1390 = vst [vmem:[#allocation2 + $0x18] sm:$0xff] %v1358
        %1391 = vst [vmem:[#allocation2 + $0x20] sm:$0xff] %v1359
        %1392 = vst [vmem:[#allocation2 + $0x28] sm:$0xff] %v1360
        %1393 = vst [vmem:[#allocation2 + $0x30] sm:$0xff] %v1361
        %1394 = vst [vmem:[#allocation2 + $0x38] sm:$0xff] %v1362
        %1395 = vst [vmem:[#allocation2 + $0x40] sm:$0xff] %v1363
        %1396 = vst [vmem:[#allocation2 + $0x48] sm:$0xff] %v1364
        %1397 = vst [vmem:[#allocation2 + $0x50] sm:$0xff] %v1365
        %1398 = vst [vmem:[#allocation2 + $0x58] sm:$0xff] %v1366
        %1399 = vst [vmem:[#allocation2 + $0x60] sm:$0xff] %v1367
        %1400 = vst [vmem:[#allocation2 + $0x68] sm:$0xff] %v1368
        %1401 = vst [vmem:[#allocation2 + $0x70] sm:$0xff] %v1369
        %1402 = vst [vmem:[#allocation2 + $0x78] sm:$0xff] %v1370
        %1403 = vst [vmem:[#allocation2 + $0x80] sm:$0xff] %v1371
        %1404 = vst [vmem:[#allocation2 + $0x88] sm:$0xff] %v1372
        %1405 = vst [vmem:[#allocation2 + $0x90] sm:$0xff] %v1373
        %1406 = vst [vmem:[#allocation2 + $0x98] sm:$0xff] %v1374
        %1407 = vst [vmem:[#allocation2 + $0xa0] sm:$0xff] %v1375
        %1408 = vst [vmem:[#allocation2 + $0xa8] sm:$0xff] %v1376
        %1409 = vst [vmem:[#allocation2 + $0xb0] sm:$0xff] %v1377
        %1410 = vst [vmem:[#allocation2 + $0xb8] sm:$0xff] %v1378
        %1411 = vst [vmem:[#allocation2 + $0xc0] sm:$0xff] %v1379
        %1412 = vst [vmem:[#allocation2 + $0xc8] sm:$0xff] %v1380
        %1413 = vst [vmem:[#allocation2 + $0xd0] sm:$0xff] %v1381
        %1414 = vst [vmem:[#allocation2 + $0xd8] sm:$0xff] %v1382
        %1415 = vst [vmem:[#allocation2 + $0xe0] sm:$0xff] %v1383
        %1416 = vst [vmem:[#allocation2 + $0xe8] sm:$0xff] %v1384
        %1417 = vst [vmem:[#allocation2 + $0xf0] sm:$0xff] %v1385
        %1418 = vst [vmem:[#allocation2 + $0xf8] sm:$0xff] %v1386
        %v1419 = vld [vmem:[#allocation3] sm:$0xff]
        %v1420 = vld [vmem:[#allocation3 + $0x8] sm:$0xff]
        %v1421 = vld [vmem:[#allocation3 + $0x10] sm:$0xff]
        %v1422 = vld [vmem:[#allocation3 + $0x18] sm:$0xff]
        %v1423 = vld [vmem:[#allocation3 + $0x20] sm:$0xff]
        %v1424 = vld [vmem:[#allocation3 + $0x28] sm:$0xff]
        %v1425 = vld [vmem:[#allocation3 + $0x30] sm:$0xff]
        %v1426 = vld [vmem:[#allocation3 + $0x38] sm:$0xff]
        %v1427 = vld [vmem:[#allocation3 + $0x40] sm:$0xff]
        %v1428 = vld [vmem:[#allocation3 + $0x48] sm:$0xff]
        %v1429 = vld [vmem:[#allocation3 + $0x50] sm:$0xff]
        %v1430 = vld [vmem:[#allocation3 + $0x58] sm:$0xff]
        %v1431 = vld [vmem:[#allocation3 + $0x60] sm:$0xff]
        %v1432 = vld [vmem:[#allocation3 + $0x68] sm:$0xff]
        %v1433 = vld [vmem:[#allocation3 + $0x70] sm:$0xff]
        %v1434 = vld [vmem:[#allocation3 + $0x78] sm:$0xff]
        %v1435 = vld [vmem:[%s393] sm:$0xff]
        %v1436 = vld [vmem:[%s393 + $0x8] sm:$0xff]
        %v1437 = vld [vmem:[%s393 + $0x10] sm:$0xff]
        %v1438 = vld [vmem:[%s393 + $0x18] sm:$0xff]
        %v1439 = vld [vmem:[%s393 + $0x20] sm:$0xff]
        %v1440 = vld [vmem:[%s393 + $0x28] sm:$0xff]
        %v1441 = vld [vmem:[%s393 + $0x30] sm:$0xff]
        %v1442 = vld [vmem:[%s393 + $0x38] sm:$0xff]
        %v1443 = vld [vmem:[%s393 + $0x40] sm:$0xff]
        %v1444 = vld [vmem:[%s393 + $0x48] sm:$0xff]
        %v1445 = vld [vmem:[%s393 + $0x50] sm:$0xff]
        %v1446 = vld [vmem:[%s393 + $0x58] sm:$0xff]
        %v1447 = vld [vmem:[%s393 + $0x60] sm:$0xff]
        %v1448 = vld [vmem:[%s393 + $0x68] sm:$0xff]
        %v1449 = vld [vmem:[%s393 + $0x70] sm:$0xff]
        %v1450 = vld [vmem:[%s393 + $0x78] sm:$0xff]
        %v1451 = vld [vmem:[%s393 + $0x80] sm:$0xff]
        %v1452 = vld [vmem:[%s393 + $0x88] sm:$0xff]
        %v1453 = vld [vmem:[%s393 + $0x90] sm:$0xff]
        %v1454 = vld [vmem:[%s393 + $0x98] sm:$0xff]
        %v1455 = vld [vmem:[%s393 + $0xa0] sm:$0xff]
        %v1456 = vld [vmem:[%s393 + $0xa8] sm:$0xff]
        %v1457 = vld [vmem:[%s393 + $0xb0] sm:$0xff]
        %v1458 = vld [vmem:[%s393 + $0xb8] sm:$0xff]
        %v1459 = vld [vmem:[%s393 + $0xc0] sm:$0xff]
        %v1460 = vld [vmem:[%s393 + $0xc8] sm:$0xff]
        %v1461 = vld [vmem:[%s393 + $0xd0] sm:$0xff]
        %v1462 = vld [vmem:[%s393 + $0xd8] sm:$0xff]
        %v1463 = vld [vmem:[%s393 + $0xe0] sm:$0xff]
        %v1464 = vld [vmem:[%s393 + $0xe8] sm:$0xff]
        %v1465 = vld [vmem:[%s393 + $0xf0] sm:$0xff]
        %v1466 = vld [vmem:[%s393 + $0xf8] sm:$0xff]
        %v1499 = vunpack.c.l.b16 %v1435
        %v1500 = vunpack.c.h.b16 %v1435
        %v1501 = vunpack.c.l.b16 %v1436
        %v1502 = vunpack.c.h.b16 %v1436
        %v1503 = vunpack.c.l.b16 %v1437
        %v1504 = vunpack.c.h.b16 %v1437
        %v1505 = vunpack.c.l.b16 %v1438
        %v1506 = vunpack.c.h.b16 %v1438
        %v1507 = vunpack.c.l.b16 %v1439
        %v1508 = vunpack.c.h.b16 %v1439
        %v1509 = vunpack.c.l.b16 %v1440
        %v1510 = vunpack.c.h.b16 %v1440
        %v1511 = vunpack.c.l.b16 %v1441
        %v1512 = vunpack.c.h.b16 %v1441
        %v1513 = vunpack.c.l.b16 %v1442
        %v1514 = vunpack.c.h.b16 %v1442
        %v1515 = vunpack.c.l.b16 %v1443
        %v1516 = vunpack.c.h.b16 %v1443
        %v1517 = vunpack.c.l.b16 %v1444
        %v1518 = vunpack.c.h.b16 %v1444
        %v1519 = vunpack.c.l.b16 %v1445
        %v1520 = vunpack.c.h.b16 %v1445
        %v1521 = vunpack.c.l.b16 %v1446
        %v1522 = vunpack.c.h.b16 %v1446
        %v1523 = vunpack.c.l.b16 %v1447
        %v1524 = vunpack.c.h.b16 %v1447
        %v1525 = vunpack.c.l.b16 %v1448
        %v1526 = vunpack.c.h.b16 %v1448
        %v1527 = vunpack.c.l.b16 %v1449
        %v1528 = vunpack.c.h.b16 %v1449
        %v1529 = vunpack.c.l.b16 %v1450
        %v1530 = vunpack.c.h.b16 %v1450
        %v1531 = vunpack.c.l.b16 %v1451
        %v1532 = vunpack.c.h.b16 %v1451
        %v1533 = vunpack.c.l.b16 %v1452
        %v1534 = vunpack.c.h.b16 %v1452
        %v1535 = vunpack.c.l.b16 %v1453
        %v1536 = vunpack.c.h.b16 %v1453
        %v1537 = vunpack.c.l.b16 %v1454
        %v1538 = vunpack.c.h.b16 %v1454
        %v1539 = vunpack.c.l.b16 %v1455
        %v1540 = vunpack.c.h.b16 %v1455
        %v1541 = vunpack.c.l.b16 %v1456
        %v1542 = vunpack.c.h.b16 %v1456
        %v1543 = vunpack.c.l.b16 %v1457
        %v1544 = vunpack.c.h.b16 %v1457
        %v1545 = vunpack.c.l.b16 %v1458
        %v1546 = vunpack.c.h.b16 %v1458
        %v1547 = vunpack.c.l.b16 %v1459
        %v1548 = vunpack.c.h.b16 %v1459
        %v1549 = vunpack.c.l.b16 %v1460
        %v1550 = vunpack.c.h.b16 %v1460
        %v1551 = vunpack.c.l.b16 %v1461
        %v1552 = vunpack.c.h.b16 %v1461
        %v1553 = vunpack.c.l.b16 %v1462
        %v1554 = vunpack.c.h.b16 %v1462
        %v1555 = vunpack.c.l.b16 %v1463
        %v1556 = vunpack.c.h.b16 %v1463
        %v1557 = vunpack.c.l.b16 %v1464
        %v1558 = vunpack.c.h.b16 %v1464
        %v1559 = vunpack.c.l.b16 %v1465
        %v1560 = vunpack.c.h.b16 %v1465
        %v1561 = vunpack.c.l.b16 %v1466
        %v1562 = vunpack.c.h.b16 %v1466
        %v1563 = vpack.c.b16 %v1503, %v1499
        %v1564 = vpack.c.b16 %v1504, %v1500
        %v1565 = vpack.c.b16 %v1505, %v1501
        %v1566 = vpack.c.b16 %v1506, %v1502
        %v1567 = vpack.c.b16 %v1511, %v1507
        %v1568 = vpack.c.b16 %v1512, %v1508
        %v1569 = vpack.c.b16 %v1513, %v1509
        %v1570 = vpack.c.b16 %v1514, %v1510
        %v1571 = vpack.c.b16 %v1519, %v1515
        %v1572 = vpack.c.b16 %v1520, %v1516
        %v1573 = vpack.c.b16 %v1521, %v1517
        %v1574 = vpack.c.b16 %v1522, %v1518
        %v1575 = vpack.c.b16 %v1527, %v1523
        %v1576 = vpack.c.b16 %v1528, %v1524
        %v1577 = vpack.c.b16 %v1529, %v1525
        %v1578 = vpack.c.b16 %v1530, %v1526
        %v1579 = vpack.c.b16 %v1535, %v1531
        %v1580 = vpack.c.b16 %v1536, %v1532
        %v1581 = vpack.c.b16 %v1537, %v1533
        %v1582 = vpack.c.b16 %v1538, %v1534
        %v1583 = vpack.c.b16 %v1543, %v1539
        %v1584 = vpack.c.b16 %v1544, %v1540
        %v1585 = vpack.c.b16 %v1545, %v1541
        %v1586 = vpack.c.b16 %v1546, %v1542
        %v1587 = vpack.c.b16 %v1551, %v1547
        %v1588 = vpack.c.b16 %v1552, %v1548
        %v1589 = vpack.c.b16 %v1553, %v1549
        %v1590 = vpack.c.b16 %v1554, %v1550
        %v1591 = vpack.c.b16 %v1559, %v1555
        %v1592 = vpack.c.b16 %v1560, %v1556
        %v1593 = vpack.c.b16 %v1561, %v1557
        %v1594 = vpack.c.b16 %v1562, %v1558
        %1627 = vmatprep.subr.bf16.mxu0 %v1564
        %1628 = vmatpush1.bf16.xpose.msra.mxu0 %v1563
        %1629 = vmatprep.subr.bf16.mxu0 %v1568
        %1630 = vmatpush1.bf16.xpose.msra.mxu0 %v1567
        %1631 = vmatprep.subr.bf16.mxu0 %v1572
        %1632 = vmatpush1.bf16.xpose.msra.mxu0 %v1571
        %1633 = vmatprep.subr.bf16.mxu0 %v1576
        %1634 = vmatpush1.bf16.xpose.msra.mxu0 %v1575
        %1635 = vmatprep.subr.bf16.mxu0 %v1580
        %1636 = vmatpush1.bf16.xpose.msra.mxu0 %v1579
        %1637 = vmatprep.subr.bf16.mxu0 %v1584
        %1638 = vmatpush1.bf16.xpose.msra.mxu0 %v1583
        %1639 = vmatprep.subr.bf16.mxu0 %v1588
        %1640 = vmatpush1.bf16.xpose.msra.mxu0 %v1587
        %1641 = vmatprep.subr.bf16.mxu0 %v1592
        %1642 = vmatpush1.bf16.xpose.msra.mxu0 %v1591
        %1643 = vmatprep.subr.bf16.mxu0 0
        %1644 = vmatpush1.bf16.xpose.msra.mxu0 0
        %1645 = vmatprep.subr.bf16.mxu0 0
        %1646 = vmatpush1.bf16.xpose.msra.mxu0 0
        %1647 = vmatprep.subr.bf16.mxu0 0
        %1648 = vmatpush1.bf16.xpose.msra.mxu0 0
        %1649 = vmatprep.subr.bf16.mxu0 0
        %1650 = vmatpush1.bf16.xpose.msra.mxu0 0
        %1651 = vmatprep.subr.bf16.mxu0 0
        %1652 = vmatpush1.bf16.xpose.msra.mxu0 0
        %1653 = vmatprep.subr.bf16.mxu0 0
        %1654 = vmatpush1.bf16.xpose.msra.mxu0 0
        %1655 = vmatprep.subr.bf16.mxu0 0
        %1656 = vmatpush1.bf16.xpose.msra.mxu0 0
        %1657 = vmatprep.subr.bf16.mxu0 0
        %1658 = vmatpush1.bf16.xpose.msra.mxu0 0
        %1659 = vmatprep.mubr.bf16.mxu0 %v746
        %1660 = vmatmul.mubr.bf16.gmra.mrb[0].mxu0 %v745
        %v1661 = vpop.f32.mrb[0].mxu0
        %v1662 = vadd.f32 0.0, %v1661
        %v1663 = vpop.f32.mrb[0].mxu0
        %v1664 = vpop.f32.mrb[0].mxu0
        %v1665 = vadd.f32 0.0, %v1664
        %v1666 = vpop.f32.mrb[0].mxu0
        %1667 = vmatprep.mubr.bf16.mxu0 %v750
        %1668 = vmatmul.mubr.bf16.gmra.mrb[0].mxu0 %v749
        %v1669 = vpop.f32.mrb[0].mxu0
        %v1670 = vadd.f32 0.0, %v1669
        %v1671 = vpop.f32.mrb[0].mxu0
        %v1672 = vpop.f32.mrb[0].mxu0
        %v1673 = vadd.f32 0.0, %v1672
        %v1674 = vpop.f32.mrb[0].mxu0
        %1675 = vmatprep.mubr.bf16.mxu0 %v754
        %1676 = vmatmul.mubr.bf16.gmra.mrb[0].mxu0 %v753
        %v1677 = vpop.f32.mrb[0].mxu0
        %v1678 = vadd.f32 0.0, %v1677
        %v1679 = vpop.f32.mrb[0].mxu0
        %v1680 = vpop.f32.mrb[0].mxu0
        %v1681 = vadd.f32 0.0, %v1680
        %v1682 = vpop.f32.mrb[0].mxu0
        %1683 = vmatprep.mubr.bf16.mxu0 %v758
        %1684 = vmatmul.mubr.bf16.gmra.mrb[0].mxu0 %v757
        %v1685 = vpop.f32.mrb[0].mxu0
        %v1686 = vadd.f32 0.0, %v1685
        %v1687 = vpop.f32.mrb[0].mxu0
        %v1688 = vpop.f32.mrb[0].mxu0
        %v1689 = vadd.f32 0.0, %v1688
        %v1690 = vpop.f32.mrb[0].mxu0
        %1691 = vmatprep.mubr.bf16.mxu0 %v762
        %1692 = vmatmul.mubr.bf16.gmra.mrb[0].mxu0 %v761
        %v1693 = vpop.f32.mrb[0].mxu0
        %v1694 = vadd.f32 0.0, %v1693
        %v1695 = vpop.f32.mrb[0].mxu0
        %v1696 = vpop.f32.mrb[0].mxu0
        %v1697 = vadd.f32 0.0, %v1696
        %v1698 = vpop.f32.mrb[0].mxu0
        %1699 = vmatprep.mubr.bf16.mxu0 %v766
        %1700 = vmatmul.mubr.bf16.gmra.mrb[0].mxu0 %v765
        %v1701 = vpop.f32.mrb[0].mxu0
        %v1702 = vadd.f32 0.0, %v1701
        %v1703 = vpop.f32.mrb[0].mxu0
        %v1704 = vpop.f32.mrb[0].mxu0
        %v1705 = vadd.f32 0.0, %v1704
        %v1706 = vpop.f32.mrb[0].mxu0
        %1707 = vmatprep.mubr.bf16.mxu0 %v770
        %1708 = vmatmul.mubr.bf16.gmra.mrb[0].mxu0 %v769
        %v1709 = vpop.f32.mrb[0].mxu0
        %v1710 = vadd.f32 0.0, %v1709
        %v1711 = vpop.f32.mrb[0].mxu0
        %v1712 = vpop.f32.mrb[0].mxu0
        %v1713 = vadd.f32 0.0, %v1712
        %v1714 = vpop.f32.mrb[0].mxu0
        %1715 = vmatprep.mubr.bf16.mxu0 %v774
        %1716 = vmatmul.mubr.bf16.gmra.mrb[0].mxu0 %v773
        %v1717 = vpop.f32.mrb[0].mxu0
        %v1718 = vadd.f32 0.0, %v1717
        %v1719 = vpop.f32.mrb[0].mxu0
        %v1720 = vpop.f32.mrb[0].mxu0
        %v1721 = vadd.f32 0.0, %v1720
        %v1722 = vpop.f32.mrb[0].mxu0
        %1723 = vdwg.mxu0
        %1724 = vmatprep.subr.bf16.mxu0 %v1566
        %1725 = vmatpush1.bf16.xpose.msra.mxu0 %v1565
        %1726 = vmatprep.subr.bf16.mxu0 %v1570
        %1727 = vmatpush1.bf16.xpose.msra.mxu0 %v1569
        %1728 = vmatprep.subr.bf16.mxu0 %v1574
        %1729 = vmatpush1.bf16.xpose.msra.mxu0 %v1573
        %1730 = vmatprep.subr.bf16.mxu0 %v1578
        %1731 = vmatpush1.bf16.xpose.msra.mxu0 %v1577
        %1732 = vmatprep.subr.bf16.mxu0 %v1582
        %1733 = vmatpush1.bf16.xpose.msra.mxu0 %v1581
        %1734 = vmatprep.subr.bf16.mxu0 %v1586
        %1735 = vmatpush1.bf16.xpose.msra.mxu0 %v1585
        %1736 = vmatprep.subr.bf16.mxu0 %v1590
        %1737 = vmatpush1.bf16.xpose.msra.mxu0 %v1589
        %1738 = vmatprep.subr.bf16.mxu0 %v1594
        %1739 = vmatpush1.bf16.xpose.msra.mxu0 %v1593
        %1740 = vmatprep.subr.bf16.mxu0 0
        %1741 = vmatpush1.bf16.xpose.msra.mxu0 0
        %1742 = vmatprep.subr.bf16.mxu0 0
        %1743 = vmatpush1.bf16.xpose.msra.mxu0 0
        %1744 = vmatprep.subr.bf16.mxu0 0
        %1745 = vmatpush1.bf16.xpose.msra.mxu0 0
        %1746 = vmatprep.subr.bf16.mxu0 0
        %1747 = vmatpush1.bf16.xpose.msra.mxu0 0
        %1748 = vmatprep.subr.bf16.mxu0 0
        %1749 = vmatpush1.bf16.xpose.msra.mxu0 0
        %1750 = vmatprep.subr.bf16.mxu0 0
        %1751 = vmatpush1.bf16.xpose.msra.mxu0 0
        %1752 = vmatprep.subr.bf16.mxu0 0
        %1753 = vmatpush1.bf16.xpose.msra.mxu0 0
        %1754 = vmatprep.subr.bf16.mxu0 0
        %1755 = vmatpush1.bf16.xpose.msra.mxu0 0
        %1756 = vmatprep.mubr.bf16.mxu0 %v748
        %1757 = vmatmul.mubr.bf16.gmra.mrb[0].mxu0 %v747
        %v1758 = vpop.f32.mrb[0].mxu0
        %v1759 = vadd.f32 %v1662, %v1758
        %v1760 = vpop.f32.mrb[0].mxu0
        %v1761 = vpop.f32.mrb[0].mxu0
        %v1762 = vadd.f32 %v1665, %v1761
        %v1763 = vpop.f32.mrb[0].mxu0
        %1764 = vmatprep.mubr.bf16.mxu0 %v752
        %1765 = vmatmul.mubr.bf16.gmra.mrb[0].mxu0 %v751
        %v1766 = vpop.f32.mrb[0].mxu0
        %v1767 = vadd.f32 %v1670, %v1766
        %v1768 = vpop.f32.mrb[0].mxu0
        %v1769 = vpop.f32.mrb[0].mxu0
        %v1770 = vadd.f32 %v1673, %v1769
        %v1771 = vpop.f32.mrb[0].mxu0
        %1772 = vmatprep.mubr.bf16.mxu0 %v756
        %1773 = vmatmul.mubr.bf16.gmra.mrb[0].mxu0 %v755
        %v1774 = vpop.f32.mrb[0].mxu0
        %v1775 = vadd.f32 %v1678, %v1774
        %v1776 = vpop.f32.mrb[0].mxu0
        %v1777 = vpop.f32.mrb[0].mxu0
        %v1778 = vadd.f32 %v1681, %v1777
        %v1779 = vpop.f32.mrb[0].mxu0
        %1780 = vmatprep.mubr.bf16.mxu0 %v760
        %1781 = vmatmul.mubr.bf16.gmra.mrb[0].mxu0 %v759
        %v1782 = vpop.f32.mrb[0].mxu0
        %v1783 = vadd.f32 %v1686, %v1782
        %v1784 = vpop.f32.mrb[0].mxu0
        %v1785 = vpop.f32.mrb[0].mxu0
        %v1786 = vadd.f32 %v1689, %v1785
        %v1787 = vpop.f32.mrb[0].mxu0
        %1788 = vmatprep.mubr.bf16.mxu0 %v764
        %1789 = vmatmul.mubr.bf16.gmra.mrb[0].mxu0 %v763
        %v1790 = vpop.f32.mrb[0].mxu0
        %v1791 = vadd.f32 %v1694, %v1790
        %v1792 = vpop.f32.mrb[0].mxu0
        %v1793 = vpop.f32.mrb[0].mxu0
        %v1794 = vadd.f32 %v1697, %v1793
        %v1795 = vpop.f32.mrb[0].mxu0
        %1796 = vmatprep.mubr.bf16.mxu0 %v768
        %1797 = vmatmul.mubr.bf16.gmra.mrb[0].mxu0 %v767
        %v1798 = vpop.f32.mrb[0].mxu0
        %v1799 = vadd.f32 %v1702, %v1798
        %v1800 = vpop.f32.mrb[0].mxu0
        %v1801 = vpop.f32.mrb[0].mxu0
        %v1802 = vadd.f32 %v1705, %v1801
        %v1803 = vpop.f32.mrb[0].mxu0
        %1804 = vmatprep.mubr.bf16.mxu0 %v772
        %1805 = vmatmul.mubr.bf16.gmra.mrb[0].mxu0 %v771
        %v1806 = vpop.f32.mrb[0].mxu0
        %v1807 = vadd.f32 %v1710, %v1806
        %v1808 = vpop.f32.mrb[0].mxu0
        %v1809 = vpop.f32.mrb[0].mxu0
        %v1810 = vadd.f32 %v1713, %v1809
        %v1811 = vpop.f32.mrb[0].mxu0
        %1812 = vmatprep.mubr.bf16.mxu0 %v776
        %1813 = vmatmul.mubr.bf16.gmra.mrb[0].mxu0 %v775
        %v1814 = vpop.f32.mrb[0].mxu0
        %v1815 = vadd.f32 %v1718, %v1814
        %v1816 = vpop.f32.mrb[0].mxu0
        %v1817 = vpop.f32.mrb[0].mxu0
        %v1818 = vadd.f32 %v1721, %v1817
        %v1819 = vpop.f32.mrb[0].mxu0
        %1820 = vdwg.mxu0
        %v1821 = vadd.f32 %v1419, %v1759
        %v1822 = vadd.f32 %v1420, %v1762
        %v1823 = vadd.f32 %v1421, %v1767
        %v1824 = vadd.f32 %v1422, %v1770
        %v1825 = vadd.f32 %v1423, %v1775
        %v1826 = vadd.f32 %v1424, %v1778
        %v1827 = vadd.f32 %v1425, %v1783
        %v1828 = vadd.f32 %v1426, %v1786
        %v1829 = vadd.f32 %v1427, %v1791
        %v1830 = vadd.f32 %v1428, %v1794
        %v1831 = vadd.f32 %v1429, %v1799
        %v1832 = vadd.f32 %v1430, %v1802
        %v1833 = vadd.f32 %v1431, %v1807
        %v1834 = vadd.f32 %v1432, %v1810
        %v1835 = vadd.f32 %v1433, %v1815
        %v1836 = vadd.f32 %v1434, %v1818
        %1837 = vst [vmem:[#allocation3] sm:$0xff] %v1821
        %1838 = vst [vmem:[#allocation3 + $0x8] sm:$0xff] %v1822
        %1839 = vst [vmem:[#allocation3 + $0x10] sm:$0xff] %v1823
        %1840 = vst [vmem:[#allocation3 + $0x18] sm:$0xff] %v1824
        %1841 = vst [vmem:[#allocation3 + $0x20] sm:$0xff] %v1825
        %1842 = vst [vmem:[#allocation3 + $0x28] sm:$0xff] %v1826
        %1843 = vst [vmem:[#allocation3 + $0x30] sm:$0xff] %v1827
        %1844 = vst [vmem:[#allocation3 + $0x38] sm:$0xff] %v1828
        %1845 = vst [vmem:[#allocation3 + $0x40] sm:$0xff] %v1829
        %1846 = vst [vmem:[#allocation3 + $0x48] sm:$0xff] %v1830
        %1847 = vst [vmem:[#allocation3 + $0x50] sm:$0xff] %v1831
        %1848 = vst [vmem:[#allocation3 + $0x58] sm:$0xff] %v1832
        %1849 = vst [vmem:[#allocation3 + $0x60] sm:$0xff] %v1833
        %1850 = vst [vmem:[#allocation3 + $0x68] sm:$0xff] %v1834
        %1851 = vst [vmem:[#allocation3 + $0x70] sm:$0xff] %v1835
        %1852 = vst [vmem:[#allocation3 + $0x78] sm:$0xff] %v1836
        %p1853 = scmp.eq.s32.totalorder %s36, 1
        // Predicated region
        $region69: #{tpu_custom_call.1} parent=43 // pred_check
          %p1854 = pneg %p1853
        $region70: #{tpu_custom_call.1} parent=43 // pred_check_branch
          %1856 = sbr.rel (%p1854) target = $region72
        $region71: #{tpu_custom_call.1} parent=43 // pred_region
          %v1857 = vld [vmem:[#allocation12] sm:$0xff]
          %v1858 = vld [vmem:[#allocation12 + $0x8] sm:$0xff]
          %v1859 = vld [vmem:[#allocation12 + $0x10] sm:$0xff]
          %v1860 = vld [vmem:[#allocation12 + $0x18] sm:$0xff]
          %v1861 = vld [vmem:[#allocation12 + $0x20] sm:$0xff]
          %v1862 = vld [vmem:[#allocation12 + $0x28] sm:$0xff]
          %v1863 = vld [vmem:[#allocation12 + $0x30] sm:$0xff]
          %v1864 = vld [vmem:[#allocation12 + $0x38] sm:$0xff]
          %v1865 = vld [vmem:[#allocation12 + $0x40] sm:$0xff]
          %v1866 = vld [vmem:[#allocation12 + $0x48] sm:$0xff]
          %v1867 = vld [vmem:[#allocation12 + $0x50] sm:$0xff]
          %v1868 = vld [vmem:[#allocation12 + $0x58] sm:$0xff]
          %v1869 = vld [vmem:[#allocation12 + $0x60] sm:$0xff]
          %v1870 = vld [vmem:[#allocation12 + $0x68] sm:$0xff]
          %v1871 = vld [vmem:[#allocation12 + $0x70] sm:$0xff]
          %v1872 = vld [vmem:[#allocation12 + $0x78] sm:$0xff]
          %v1873 = vld [vmem:[#allocation3] sm:$0xff]
          %v1874 = vld [vmem:[#allocation3 + $0x8] sm:$0xff]
          %v1875 = vld [vmem:[#allocation3 + $0x10] sm:$0xff]
          %v1876 = vld [vmem:[#allocation3 + $0x18] sm:$0xff]
          %v1877 = vld [vmem:[#allocation3 + $0x20] sm:$0xff]
          %v1878 = vld [vmem:[#allocation3 + $0x28] sm:$0xff]
          %v1879 = vld [vmem:[#allocation3 + $0x30] sm:$0xff]
          %v1880 = vld [vmem:[#allocation3 + $0x38] sm:$0xff]
          %v1881 = vld [vmem:[#allocation3 + $0x40] sm:$0xff]
          %v1882 = vld [vmem:[#allocation3 + $0x48] sm:$0xff]
          %v1883 = vld [vmem:[#allocation3 + $0x50] sm:$0xff]
          %v1884 = vld [vmem:[#allocation3 + $0x58] sm:$0xff]
          %v1885 = vld [vmem:[#allocation3 + $0x60] sm:$0xff]
          %v1886 = vld [vmem:[#allocation3 + $0x68] sm:$0xff]
          %v1887 = vld [vmem:[#allocation3 + $0x70] sm:$0xff]
          %v1888 = vld [vmem:[#allocation3 + $0x78] sm:$0xff]
          %v1889 = vmul.f32 %v1857, %v1873
          %v1890 = vmul.f32 %v1858, %v1874
          %v1891 = vmul.f32 %v1859, %v1875
          %v1892 = vmul.f32 %v1860, %v1876
          %v1893 = vmul.f32 %v1861, %v1877
          %v1894 = vmul.f32 %v1862, %v1878
          %v1895 = vmul.f32 %v1863, %v1879
          %v1896 = vmul.f32 %v1864, %v1880
          %v1897 = vmul.f32 %v1865, %v1881
          %v1898 = vmul.f32 %v1866, %v1882
          %v1899 = vmul.f32 %v1867, %v1883
          %v1900 = vmul.f32 %v1868, %v1884
          %v1901 = vmul.f32 %v1869, %v1885
          %v1902 = vmul.f32 %v1870, %v1886
          %v1903 = vmul.f32 %v1871, %v1887
          %v1904 = vmul.f32 %v1872, %v1888
          %v1905 = vpack.c.bf16 %v1890, %v1889
          %v1906 = vpack.c.bf16 %v1892, %v1891
          %v1907 = vpack.c.bf16 %v1894, %v1893
          %v1908 = vpack.c.bf16 %v1896, %v1895
          %v1909 = vpack.c.bf16 %v1898, %v1897
          %v1910 = vpack.c.bf16 %v1900, %v1899
          %v1911 = vpack.c.bf16 %v1902, %v1901
          %v1912 = vpack.c.bf16 %v1904, %v1903
          %v1913 = vld [vmem:[%s402] sm:$0xf]
          %v1914 = vld [vmem:[%s402 + $0x4] sm:$0xf]
          %v1915 = vld [vmem:[%s402 + $0x8] sm:$0xf]
          %v1916 = vld [vmem:[%s402 + $0xc] sm:$0xf]
          %v1917 = vld [vmem:[%s402 + $0x10] sm:$0xf]
          %v1918 = vld [vmem:[%s402 + $0x14] sm:$0xf]
          %v1919 = vld [vmem:[%s402 + $0x18] sm:$0xf]
          %v1920 = vld [vmem:[%s402 + $0x1c] sm:$0xf]
          %v1921 = vld [vmem:[%s402 + $0x20] sm:$0xf]
          %v1922 = vld [vmem:[%s402 + $0x24] sm:$0xf]
          %v1923 = vld [vmem:[%s402 + $0x28] sm:$0xf]
          %v1924 = vld [vmem:[%s402 + $0x2c] sm:$0xf]
          %v1925 = vld [vmem:[%s402 + $0x30] sm:$0xf]
          %v1926 = vld [vmem:[%s402 + $0x34] sm:$0xf]
          %v1927 = vld [vmem:[%s402 + $0x38] sm:$0xf]
          %v1928 = vld [vmem:[%s402 + $0x3c] sm:$0xf]
          %v1929 = vld [vmem:[%s402 + $0x40] sm:$0xf]
          %v1930 = vld [vmem:[%s402 + $0x44] sm:$0xf]
          %v1931 = vld [vmem:[%s402 + $0x48] sm:$0xf]
          %v1932 = vld [vmem:[%s402 + $0x4c] sm:$0xf]
          %v1933 = vld [vmem:[%s402 + $0x50] sm:$0xf]
          %v1934 = vld [vmem:[%s402 + $0x54] sm:$0xf]
          %v1935 = vld [vmem:[%s402 + $0x58] sm:$0xf]
          %v1936 = vld [vmem:[%s402 + $0x5c] sm:$0xf]
          %v1937 = vld [vmem:[%s402 + $0x60] sm:$0xf]
          %v1938 = vld [vmem:[%s402 + $0x64] sm:$0xf]
          %v1939 = vld [vmem:[%s402 + $0x68] sm:$0xf]
          %v1940 = vld [vmem:[%s402 + $0x6c] sm:$0xf]
          %v1941 = vld [vmem:[%s402 + $0x70] sm:$0xf]
          %v1942 = vld [vmem:[%s402 + $0x74] sm:$0xf]
          %v1943 = vld [vmem:[%s402 + $0x78] sm:$0xf]
          %v1944 = vld [vmem:[%s402 + $0x7c] sm:$0xf]
          %v1977 = vunpack.c.l.b16 %v1913
          %v1978 = vunpack.c.l.b16 %v1914
          %v1979 = vunpack.c.l.b16 %v1915
          %v1980 = vunpack.c.l.b16 %v1916
          %v1981 = vunpack.c.l.b16 %v1917
          %v1982 = vunpack.c.l.b16 %v1918
          %v1983 = vunpack.c.l.b16 %v1919
          %v1984 = vunpack.c.l.b16 %v1920
          %v1985 = vunpack.c.l.b16 %v1921
          %v1986 = vunpack.c.l.b16 %v1922
          %v1987 = vunpack.c.l.b16 %v1923
          %v1988 = vunpack.c.l.b16 %v1924
          %v1989 = vunpack.c.l.b16 %v1925
          %v1990 = vunpack.c.l.b16 %v1926
          %v1991 = vunpack.c.l.b16 %v1927
          %v1992 = vunpack.c.l.b16 %v1928
          %v1993 = vunpack.c.l.b16 %v1929
          %v1994 = vunpack.c.l.b16 %v1930
          %v1995 = vunpack.c.l.b16 %v1931
          %v1996 = vunpack.c.l.b16 %v1932
          %v1997 = vunpack.c.l.b16 %v1933
          %v1998 = vunpack.c.l.b16 %v1934
          %v1999 = vunpack.c.l.b16 %v1935
          %v2000 = vunpack.c.l.b16 %v1936
          %v2001 = vunpack.c.l.b16 %v1937
          %v2002 = vunpack.c.l.b16 %v1938
          %v2003 = vunpack.c.l.b16 %v1939
          %v2004 = vunpack.c.l.b16 %v1940
          %v2005 = vunpack.c.l.b16 %v1941
          %v2006 = vunpack.c.l.b16 %v1942
          %v2007 = vunpack.c.l.b16 %v1943
          %v2008 = vunpack.c.l.b16 %v1944
          %v2009 = vpack.c.b16 %v1978, %v1977
          %v2010 = vpack.c.b16 %v1980, %v1979
          %v2011 = vpack.c.b16 %v1982, %v1981
          %v2012 = vpack.c.b16 %v1984, %v1983
          %v2013 = vpack.c.b16 %v1986, %v1985
          %v2014 = vpack.c.b16 %v1988, %v1987
          %v2015 = vpack.c.b16 %v1990, %v1989
          %v2016 = vpack.c.b16 %v1992, %v1991
          %v2017 = vpack.c.b16 %v1994, %v1993
          %v2018 = vpack.c.b16 %v1996, %v1995
          %v2019 = vpack.c.b16 %v1998, %v1997
          %v2020 = vpack.c.b16 %v2000, %v1999
          %v2021 = vpack.c.b16 %v2002, %v2001
          %v2022 = vpack.c.b16 %v2004, %v2003
          %v2023 = vpack.c.b16 %v2006, %v2005
          %v2024 = vpack.c.b16 %v2008, %v2007
          %2041 = vmatprep.subr.bf16.mxu0 0
          %2042 = vmatpush1.bf16.xpose.msra.mxu0 %v2009
          %2043 = vmatprep.subr.bf16.mxu0 0
          %2044 = vmatpush1.bf16.xpose.msra.mxu0 %v2010
          %2045 = vmatprep.subr.bf16.mxu0 0
          %2046 = vmatpush1.bf16.xpose.msra.mxu0 %v2011
          %2047 = vmatprep.subr.bf16.mxu0 0
          %2048 = vmatpush1.bf16.xpose.msra.mxu0 %v2012
          %2049 = vmatprep.subr.bf16.mxu0 0
          %2050 = vmatpush1.bf16.xpose.msra.mxu0 %v2013
          %2051 = vmatprep.subr.bf16.mxu0 0
          %2052 = vmatpush1.bf16.xpose.msra.mxu0 %v2014
          %2053 = vmatprep.subr.bf16.mxu0 0
          %2054 = vmatpush1.bf16.xpose.msra.mxu0 %v2015
          %2055 = vmatprep.subr.bf16.mxu0 0
          %2056 = vmatpush1.bf16.xpose.msra.mxu0 %v2016
          %2057 = vmatprep.subr.bf16.mxu0 0
          %2058 = vmatpush1.bf16.xpose.msra.mxu0 %v2017
          %2059 = vmatprep.subr.bf16.mxu0 0
          %2060 = vmatpush1.bf16.xpose.msra.mxu0 %v2018
          %2061 = vmatprep.subr.bf16.mxu0 0
          %2062 = vmatpush1.bf16.xpose.msra.mxu0 %v2019
          %2063 = vmatprep.subr.bf16.mxu0 0
          %2064 = vmatpush1.bf16.xpose.msra.mxu0 %v2020
          %2065 = vmatprep.subr.bf16.mxu0 0
          %2066 = vmatpush1.bf16.xpose.msra.mxu0 %v2021
          %2067 = vmatprep.subr.bf16.mxu0 0
          %2068 = vmatpush1.bf16.xpose.msra.mxu0 %v2022
          %2069 = vmatprep.subr.bf16.mxu0 0
          %2070 = vmatpush1.bf16.xpose.msra.mxu0 %v2023
          %2071 = vmatprep.subr.bf16.mxu0 0
          %2072 = vmatpush1.bf16.xpose.msra.mxu0 %v2024
          %2073 = vmatprep.mubr.bf16.mxu0 0
          %2074 = vmatmul.mubr.bf16.gmra.mrb[0].mxu0 %v1905
          %v2075 = vpop.f32.mrb[0].mxu0
          %v2076 = vadd.f32 0.0, %v2075
          %v2077 = vpop.f32.mrb[0].mxu0
          %v2078 = vadd.f32 0.0, %v2077
          %v2079 = vpop.f32.mrb[0].mxu0
          %v2080 = vadd.f32 0.0, %v2079
          %v2081 = vpop.f32.mrb[0].mxu0
          %v2082 = vadd.f32 0.0, %v2081
          %2083 = vmatprep.mubr.bf16.mxu0 0
          %2084 = vmatmul.mubr.bf16.gmra.mrb[0].mxu0 %v1906
          %v2085 = vpop.f32.mrb[0].mxu0
          %v2086 = vadd.f32 0.0, %v2085
          %v2087 = vpop.f32.mrb[0].mxu0
          %v2088 = vadd.f32 0.0, %v2087
          %v2089 = vpop.f32.mrb[0].mxu0
          %v2090 = vadd.f32 0.0, %v2089
          %v2091 = vpop.f32.mrb[0].mxu0
          %v2092 = vadd.f32 0.0, %v2091
          %2093 = vmatprep.mubr.bf16.mxu0 0
          %2094 = vmatmul.mubr.bf16.gmra.mrb[0].mxu0 %v1907
          %v2095 = vpop.f32.mrb[0].mxu0
          %v2096 = vadd.f32 0.0, %v2095
          %v2097 = vpop.f32.mrb[0].mxu0
          %v2098 = vadd.f32 0.0, %v2097
          %v2099 = vpop.f32.mrb[0].mxu0
          %v2100 = vadd.f32 0.0, %v2099
          %v2101 = vpop.f32.mrb[0].mxu0
          %v2102 = vadd.f32 0.0, %v2101
          %2103 = vmatprep.mubr.bf16.mxu0 0
          %2104 = vmatmul.mubr.bf16.gmra.mrb[0].mxu0 %v1908
          %v2105 = vpop.f32.mrb[0].mxu0
          %v2106 = vadd.f32 0.0, %v2105
          %v2107 = vpop.f32.mrb[0].mxu0
          %v2108 = vadd.f32 0.0, %v2107
          %v2109 = vpop.f32.mrb[0].mxu0
          %v2110 = vadd.f32 0.0, %v2109
          %v2111 = vpop.f32.mrb[0].mxu0
          %v2112 = vadd.f32 0.0, %v2111
          %2113 = vmatprep.mubr.bf16.mxu0 0
          %2114 = vmatmul.mubr.bf16.gmra.mrb[0].mxu0 %v1909
          %v2115 = vpop.f32.mrb[0].mxu0
          %v2116 = vadd.f32 0.0, %v2115
          %v2117 = vpop.f32.mrb[0].mxu0
          %v2118 = vadd.f32 0.0, %v2117
          %v2119 = vpop.f32.mrb[0].mxu0
          %v2120 = vadd.f32 0.0, %v2119
          %v2121 = vpop.f32.mrb[0].mxu0
          %v2122 = vadd.f32 0.0, %v2121
          %2123 = vmatprep.mubr.bf16.mxu0 0
          %2124 = vmatmul.mubr.bf16.gmra.mrb[0].mxu0 %v1910
          %v2125 = vpop.f32.mrb[0].mxu0
          %v2126 = vadd.f32 0.0, %v2125
          %v2127 = vpop.f32.mrb[0].mxu0
          %v2128 = vadd.f32 0.0, %v2127
          %v2129 = vpop.f32.mrb[0].mxu0
          %v2130 = vadd.f32 0.0, %v2129
          %v2131 = vpop.f32.mrb[0].mxu0
          %v2132 = vadd.f32 0.0, %v2131
          %2133 = vmatprep.mubr.bf16.mxu0 0
          %2134 = vmatmul.mubr.bf16.gmra.mrb[0].mxu0 %v1911
          %v2135 = vpop.f32.mrb[0].mxu0
          %v2136 = vadd.f32 0.0, %v2135
          %v2137 = vpop.f32.mrb[0].mxu0
          %v2138 = vadd.f32 0.0, %v2137
          %v2139 = vpop.f32.mrb[0].mxu0
          %v2140 = vadd.f32 0.0, %v2139
          %v2141 = vpop.f32.mrb[0].mxu0
          %v2142 = vadd.f32 0.0, %v2141
          %2143 = vmatprep.mubr.bf16.mxu0 0
          %2144 = vmatmul.mubr.bf16.gmra.mrb[0].mxu0 %v1912
          %v2145 = vpop.f32.mrb[0].mxu0
          %v2146 = vadd.f32 0.0, %v2145
          %v2147 = vpop.f32.mrb[0].mxu0
          %v2148 = vadd.f32 0.0, %v2147
          %v2149 = vpop.f32.mrb[0].mxu0
          %v2150 = vadd.f32 0.0, %v2149
          %v2151 = vpop.f32.mrb[0].mxu0
          %v2152 = vadd.f32 0.0, %v2151
          %2153 = vdwg.mxu0
          %v2154 = vld [vmem:[#allocation2] sm:$0xff]
          %v2155 = vld [vmem:[#allocation2 + $0x8] sm:$0xff]
          %v2156 = vld [vmem:[#allocation2 + $0x10] sm:$0xff]
          %v2157 = vld [vmem:[#allocation2 + $0x18] sm:$0xff]
          %v2158 = vld [vmem:[#allocation2 + $0x20] sm:$0xff]
          %v2159 = vld [vmem:[#allocation2 + $0x28] sm:$0xff]
          %v2160 = vld [vmem:[#allocation2 + $0x30] sm:$0xff]
          %v2161 = vld [vmem:[#allocation2 + $0x38] sm:$0xff]
          %v2162 = vld [vmem:[#allocation2 + $0x40] sm:$0xff]
          %v2163 = vld [vmem:[#allocation2 + $0x48] sm:$0xff]
          %v2164 = vld [vmem:[#allocation2 + $0x50] sm:$0xff]
          %v2165 = vld [vmem:[#allocation2 + $0x58] sm:$0xff]
          %v2166 = vld [vmem:[#allocation2 + $0x60] sm:$0xff]
          %v2167 = vld [vmem:[#allocation2 + $0x68] sm:$0xff]
          %v2168 = vld [vmem:[#allocation2 + $0x70] sm:$0xff]
          %v2169 = vld [vmem:[#allocation2 + $0x78] sm:$0xff]
          %v2170 = vld [vmem:[#allocation2 + $0x80] sm:$0xff]
          %v2171 = vld [vmem:[#allocation2 + $0x88] sm:$0xff]
          %v2172 = vld [vmem:[#allocation2 + $0x90] sm:$0xff]
          %v2173 = vld [vmem:[#allocation2 + $0x98] sm:$0xff]
          %v2174 = vld [vmem:[#allocation2 + $0xa0] sm:$0xff]
          %v2175 = vld [vmem:[#allocation2 + $0xa8] sm:$0xff]
          %v2176 = vld [vmem:[#allocation2 + $0xb0] sm:$0xff]
          %v2177 = vld [vmem:[#allocation2 + $0xb8] sm:$0xff]
          %v2178 = vld [vmem:[#allocation2 + $0xc0] sm:$0xff]
          %v2179 = vld [vmem:[#allocation2 + $0xc8] sm:$0xff]
          %v2180 = vld [vmem:[#allocation2 + $0xd0] sm:$0xff]
          %v2181 = vld [vmem:[#allocation2 + $0xd8] sm:$0xff]
          %v2182 = vld [vmem:[#allocation2 + $0xe0] sm:$0xff]
          %v2183 = vld [vmem:[#allocation2 + $0xe8] sm:$0xff]
          %v2184 = vld [vmem:[#allocation2 + $0xf0] sm:$0xff]
          %v2185 = vld [vmem:[#allocation2 + $0xf8] sm:$0xff]
          %v2186 = vadd.f32 %v2154, %v2076
          %v2187 = vadd.f32 %v2155, %v2078
          %v2188 = vadd.f32 %v2156, %v2080
          %v2189 = vadd.f32 %v2157, %v2082
          %v2190 = vadd.f32 %v2158, %v2086
          %v2191 = vadd.f32 %v2159, %v2088
          %v2192 = vadd.f32 %v2160, %v2090
          %v2193 = vadd.f32 %v2161, %v2092
          %v2194 = vadd.f32 %v2162, %v2096
          %v2195 = vadd.f32 %v2163, %v2098
          %v2196 = vadd.f32 %v2164, %v2100
          %v2197 = vadd.f32 %v2165, %v2102
          %v2198 = vadd.f32 %v2166, %v2106
          %v2199 = vadd.f32 %v2167, %v2108
          %v2200 = vadd.f32 %v2168, %v2110
          %v2201 = vadd.f32 %v2169, %v2112
          %v2202 = vadd.f32 %v2170, %v2116
          %v2203 = vadd.f32 %v2171, %v2118
          %v2204 = vadd.f32 %v2172, %v2120
          %v2205 = vadd.f32 %v2173, %v2122
          %v2206 = vadd.f32 %v2174, %v2126
          %v2207 = vadd.f32 %v2175, %v2128
          %v2208 = vadd.f32 %v2176, %v2130
          %v2209 = vadd.f32 %v2177, %v2132
          %v2210 = vadd.f32 %v2178, %v2136
          %v2211 = vadd.f32 %v2179, %v2138
          %v2212 = vadd.f32 %v2180, %v2140
          %v2213 = vadd.f32 %v2181, %v2142
          %v2214 = vadd.f32 %v2182, %v2146
          %v2215 = vadd.f32 %v2183, %v2148
          %v2216 = vadd.f32 %v2184, %v2150
          %v2217 = vadd.f32 %v2185, %v2152
          %v2218 = vld [vmem:[%s464] sm:$0x3]
          %v2220 = vlaneseq
          %v2221 = vshrl.u32 %v2220, 7
          %v2222 = vsub.s32 0, %v2221
          %v2223 = vrot.slane %v2218, %v2222
          %v2224 = vlaneseq
          %v2225 = vshrl.u32 %v2224, 7
          %v2226 = vsub.s32 1, %v2225
          %v2227 = vrot.slane %v2218, %v2226
          %v2230 = vadd.f32 %v2186, %v2223
          %v2231 = vadd.f32 %v2187, %v2227
          %v2232 = vadd.f32 %v2188, %v2223
          %v2233 = vadd.f32 %v2189, %v2227
          %v2234 = vadd.f32 %v2190, %v2223
          %v2235 = vadd.f32 %v2191, %v2227
          %v2236 = vadd.f32 %v2192, %v2223
          %v2237 = vadd.f32 %v2193, %v2227
          %v2238 = vadd.f32 %v2194, %v2223
          %v2239 = vadd.f32 %v2195, %v2227
          %v2240 = vadd.f32 %v2196, %v2223
          %v2241 = vadd.f32 %v2197, %v2227
          %v2242 = vadd.f32 %v2198, %v2223
          %v2243 = vadd.f32 %v2199, %v2227
          %v2244 = vadd.f32 %v2200, %v2223
          %v2245 = vadd.f32 %v2201, %v2227
          %v2246 = vadd.f32 %v2202, %v2223
          %v2247 = vadd.f32 %v2203, %v2227
          %v2248 = vadd.f32 %v2204, %v2223
          %v2249 = vadd.f32 %v2205, %v2227
          %v2250 = vadd.f32 %v2206, %v2223
          %v2251 = vadd.f32 %v2207, %v2227
          %v2252 = vadd.f32 %v2208, %v2223
          %v2253 = vadd.f32 %v2209, %v2227
          %v2254 = vadd.f32 %v2210, %v2223
          %v2255 = vadd.f32 %v2211, %v2227
          %v2256 = vadd.f32 %v2212, %v2223
          %v2257 = vadd.f32 %v2213, %v2227
          %v2258 = vadd.f32 %v2214, %v2223
          %v2259 = vadd.f32 %v2215, %v2227
          %v2260 = vadd.f32 %v2216, %v2223
          %v2261 = vadd.f32 %v2217, %v2227
          %2262 = vst [vmem:[%s453] sm:$0xff] %v2230
          %2263 = vst [vmem:[%s453 + $0x8] sm:$0xff] %v2231
          %2264 = vst [vmem:[%s453 + $0x10] sm:$0xff] %v2232
          %2265 = vst [vmem:[%s453 + $0x18] sm:$0xff] %v2233
          %2266 = vst [vmem:[%s453 + $0x20] sm:$0xff] %v2234
          %2267 = vst [vmem:[%s453 + $0x28] sm:$0xff] %v2235
          %2268 = vst [vmem:[%s453 + $0x30] sm:$0xff] %v2236
          %2269 = vst [vmem:[%s453 + $0x38] sm:$0xff] %v2237
          %2270 = vst [vmem:[%s453 + $0x40] sm:$0xff] %v2238
          %2271 = vst [vmem:[%s453 + $0x48] sm:$0xff] %v2239
          %2272 = vst [vmem:[%s453 + $0x50] sm:$0xff] %v2240
          %2273 = vst [vmem:[%s453 + $0x58] sm:$0xff] %v2241
          %2274 = vst [vmem:[%s453 + $0x60] sm:$0xff] %v2242
          %2275 = vst [vmem:[%s453 + $0x68] sm:$0xff] %v2243
          %2276 = vst [vmem:[%s453 + $0x70] sm:$0xff] %v2244
          %2277 = vst [vmem:[%s453 + $0x78] sm:$0xff] %v2245
          %2278 = vst [vmem:[%s453 + $0x80] sm:$0xff] %v2246
          %2279 = vst [vmem:[%s453 + $0x88] sm:$0xff] %v2247
          %2280 = vst [vmem:[%s453 + $0x90] sm:$0xff] %v2248
          %2281 = vst [vmem:[%s453 + $0x98] sm:$0xff] %v2249
          %2282 = vst [vmem:[%s453 + $0xa0] sm:$0xff] %v2250
          %2283 = vst [vmem:[%s453 + $0xa8] sm:$0xff] %v2251
          %2284 = vst [vmem:[%s453 + $0xb0] sm:$0xff] %v2252
          %2285 = vst [vmem:[%s453 + $0xb8] sm:$0xff] %v2253
          %2286 = vst [vmem:[%s453 + $0xc0] sm:$0xff] %v2254
          %2287 = vst [vmem:[%s453 + $0xc8] sm:$0xff] %v2255
          %2288 = vst [vmem:[%s453 + $0xd0] sm:$0xff] %v2256
          %2289 = vst [vmem:[%s453 + $0xd8] sm:$0xff] %v2257
          %2290 = vst [vmem:[%s453 + $0xe0] sm:$0xff] %v2258
          %2291 = vst [vmem:[%s453 + $0xe8] sm:$0xff] %v2259
          %2292 = vst [vmem:[%s453 + $0xf0] sm:$0xff] %v2260
          %2293 = vst [vmem:[%s453 + $0xf8] sm:$0xff] %v2261
        $region72: #{tpu_custom_call.1} parent=43 // pred_fallthru
          _
        %s2294 = sand.u32 %s218, 1
        %s2295 = scalar_lea.sflag [#allocation6], %s2294
        %s2296 = sand.u32 %s218, 1
        %s2297 = smul.addr %s2296, 256
        %s2298 = scalar_lea.vmem [#allocation13], %s2297
        // Predicated region
        $region73: #{tpu_custom_call.1} parent=43 // pred_check
          %p2299 = pneg %p228
        $region74: #{tpu_custom_call.1} parent=43 // pred_check_branch
          %2301 = sbr.rel (%p2299) target = $region76
        $region75: #{tpu_custom_call.1} parent=43 // pred_region
          %s2302 = smul.u32 16, %s34
          %s2303 = smul.u32 2, %s35
          %s2305 = ssub.s32 4096, 4096
          %2306 = vsyncadd %s2295, %s2305
          %s2307 = smul.addr %s2302, 4
          %s2308 = sadd.s32 %s2303, %s2307
          %s2309 = smul.addr %s2308, 128
          %s2310 = scalar_lea.hbm %s6, %s2309
          %s2311 = sshll.u32 %s2298, 4
          %s2312 = int_to_ptr.vmem [resolvable:$true] %s2311
          %2317 = dma.vmem_to_hbm [thread:$0]  %s2312, 4096, %s2310, %s2295, 256, 512, 16
        $region76: #{tpu_custom_call.1} parent=43 // pred_fallthru
          _
      $region44: #{tpu_custom_call.1} parent=5 // pred_fallthru
        _
      %p2318 = scmp.le.s32.totalorder 2, %s24
      // Predicated region
      $region77: #{tpu_custom_call.1} parent=5 // pred_check
        %p2319 = pneg %p2318
      $region78: #{tpu_custom_call.1} parent=5 // pred_check_branch
        %2321 = sbr.rel (%p2319) target = $region80
      $region79: #{tpu_custom_call.1} parent=5 // pred_region
        %s2322 = ssub.s32 %s24, 2
        // Predicated region
        $region81: #{tpu_custom_call.1} parent=79 // pred_check
          %p2323 = pneg %p234
        $region82: #{tpu_custom_call.1} parent=79 // pred_check_branch
          %2325 = sbr.rel (%p2323) target = $region84
        $region83: #{tpu_custom_call.1} parent=79 // pred_region
          %s2326 = sand.u32 %s219, 1
          %s2327 = scalar_lea.sflag [#allocation6], %s2326
          %s2328 = sand.u32 %s219, 1
          %s2329 = smul.addr %s2328, 256
          %s2330 = scalar_lea.vmem [#allocation13], %s2329
          %2331 = dma.done %s2327, 4096
        $region84: #{tpu_custom_call.1} parent=79 // pred_fallthru
          _
      $region80: #{tpu_custom_call.1} parent=5 // pred_fallthru
        _
    $region6: #{tpu_custom_call.1} parent=1 // loop_footer
      %s28 = sadd.s32 1, %s24
    $region7: #{tpu_custom_call.1} parent=1 // loop_footer_branch
      %23 = sbr.rel target = $region3
    $region8: #{tpu_custom_call.1} parent=1 // loop_exit
      _
    %2332 = vsyncpa [#allocation5], 1
    %s2333 = scalar_lea.sflag [#allocation5], 1
    %2334 = vsyncpa %s2333, 1
    %2335 = vsyncpa [#allocation8], 1
    %s2336 = scalar_lea.sflag [#allocation8], 1
    %2337 = vsyncpa %s2336, 1
    %2338 = vsyncpa [#allocation11], 1
    %s2339 = scalar_lea.sflag [#allocation11], 1
    %2340 = vsyncpa %s2339, 1
    %2341 = vsyncpa [#allocation6], 1
    %s2342 = scalar_lea.sflag [#allocation6], 1
    %2343 = vsyncpa %s2342, 1

</llo_original>
